<compile_context>
chip_gen: v5e
topology: v5e:2x2
jax: 0.10.0
libtpu: 0.0.40
codegen_flags: <defaults>
</compile_context>

<pallas_src>
import functools

import jax
import jax.numpy as jnp
from jax import lax
from jax.experimental import pallas as pl
from jax.experimental.pallas import tpu as pltpu

# Plain Python float (weak-typed) -> not captured as a traced constant.
_NEG_INF = -1e30


def _round_up(x, m):
    return ((x + m - 1) // m) * m


def _admil_kernel(h_ref, w1_ref, b1_ref, w2_ref, b2_ref,
                  wab_ref, bab_ref, wc_ref, bc_ref,        # inputs
                  m_ref, logits_ref,                        # outputs
                  m_scr, l_scr, acc_scr,                    # scratch
                  *, n_valid, size3):
    i = pl.program_id(0)
    tile_n = h_ref.shape[0]

    @pl.when(i == 0)
    def _init():
        m_scr[...] = jnp.full_like(m_scr, _NEG_INF)
        l_scr[...] = jnp.zeros_like(l_scr)
        acc_scr[...] = jnp.zeros_like(acc_scr)

    # ---- FC stack: 2x (Linear + ReLU).  Dropout omitted (eval mode). ----
    mm_dtype = w1_ref.dtype     # bf16 or f32 matmul operands; accumulation f32
    h = h_ref[...]
    h1 = jnp.maximum(
        jnp.dot(h, w1_ref[...], preferred_element_type=jnp.float32)
        + b1_ref[...], 0.0)
    h2 = jnp.maximum(
        jnp.dot(h1.astype(mm_dtype), w2_ref[...],
                preferred_element_type=jnp.float32) + b2_ref[...], 0.0)

    # ---- Gated attention net: fused (Wa | Wb) projection, tanh/sigmoid gates.
    g = jnp.dot(h2.astype(mm_dtype), wab_ref[...],
                preferred_element_type=jnp.float32) + bab_ref[...]
    gate_a = jnp.tanh(g[:, :size3])
    gate_b = jax.nn.sigmoid(g[:, size3:])
    gated = gate_a * gate_b                                     # [tile_n, size3]

    # Attention logits produced directly as a lane-dense row [1, tile_n]:
    #   logits[0, n] = sum_d wc[0, d] * gated[n, d] + bc
    logits = lax.dot_general(
        wc_ref[...], gated,
        dimension_numbers=(((1,), (1,)), ((), ())),
        preferred_element_type=jnp.float32) + bc_ref[...]       # [1, tile_n]

    # Mask rows of the (possibly partial) last tile.
    col = i * tile_n + lax.broadcasted_iota(jnp.int32, (1, tile_n), 1)
    logits = jnp.where(col < n_valid, logits, _NEG_INF)
    logits_ref[...] = logits                                    # lane-dense store

    # ---- Online softmax accumulation over the instance axis. ----
    m_prev = m_scr[...]                                         # [1, 1]
    m_new = jnp.maximum(m_prev, jnp.max(logits, axis=1, keepdims=True))
    alpha = jnp.exp(m_prev - m_new)                             # [1, 1]
    p = jnp.exp(logits - m_new)                                 # [1, tile_n]
    l_scr[...] = alpha * l_scr[...] + jnp.sum(p, axis=1, keepdims=True)
    acc_scr[...] = alpha * acc_scr[...] + jnp.dot(
        p, h2, preferred_element_type=jnp.float32)              # [1, size2]
    m_scr[...] = m_new

    @pl.when(i == pl.num_programs(0) - 1)
    def _finalize():
        m_ref[...] = acc_scr[...] * pl.reciprocal(l_scr[...], approx=True)


def admil_no_classifier_forward(h, params, *, tile_n=256,
                                matmul_dtype=jnp.float32):
    """h: [N, size0] float32.  Returns (M [1, size2], A [1, N])."""
    N, s0 = h.shape
    s1 = params["w1"].shape[1]
    s2 = params["w2"].shape[1]
    s3 = params["wa"].shape[1]

    # Fused gate weights (Wa | Wb); Wc as a [1, size3] row; bc as [1, 1].
    wab = jnp.concatenate([params["wa"], params["wb"]], axis=1)   # [s2, 2*s3]
    bab = jnp.concatenate([params["ba"], params["bb"]], axis=1)   # [1, 2*s3]
    wc_row = params["wc"].reshape(1, s3)
    bc = params["bc"].reshape(1, 1)

    # Tile size: multiple of 8; multiple of 128 whenever more than one tile is
    # needed so the lane-dense [1, tile_n] logit blocks stay (8,128)-legal.
    if N <= tile_n:
        tile_n = max(8, _round_up(N, 8))
    else:
        tile_n = _round_up(tile_n, 128)
    n_pad = _round_up(N, tile_n)
    if n_pad != N:
        h = jnp.pad(h, ((0, n_pad - N), (0, 0)))
    grid = n_pad // tile_n

    # Optional bf16 matmul operands (v6e/v7x); biases / elementwise stay f32.
    h_in = h.astype(matmul_dtype)
    w1 = params["w1"].astype(matmul_dtype)
    w2 = params["w2"].astype(matmul_dtype)
    wab = wab.astype(matmul_dtype)

    def const(shape):   # VMEM-resident across all grid steps
        return pl.BlockSpec(shape, lambda i: (0, 0))

    kernel = functools.partial(_admil_kernel, n_valid=N, size3=s3)

    m, logits = pl.pallas_call(
        kernel,
        out_shape=(jax.ShapeDtypeStruct((1, s2), jnp.float32),      # M
                   jax.ShapeDtypeStruct((1, n_pad), jnp.float32)),  # raw logits
        grid_spec=pltpu.PrefetchScalarGridSpec(
            num_scalar_prefetch=0,
            grid=(grid,),
            in_specs=[
                pl.BlockSpec((tile_n, s0), lambda i: (i, 0)),  # h: streamed
                const((s0, s1)), const((1, s1)),               # W1, b1
                const((s1, s2)), const((1, s2)),               # W2, b2
                const((s2, 2 * s3)), const((1, 2 * s3)),       # Wa|Wb, ba|bb
                const((1, s3)), const((1, 1)),                 # Wc row, bc
            ],
            out_specs=(
                pl.BlockSpec((1, s2), lambda i: (0, 0)),       # M (resident)
                pl.BlockSpec((1, tile_n), lambda i: (0, i)),   # logits (lane-dense)
            ),
            scratch_shapes=[
                pltpu.VMEM((1, 1), jnp.float32),    # running max
                pltpu.VMEM((1, 1), jnp.float32),    # running sum
                pltpu.VMEM((1, s2), jnp.float32),   # weighted-h2 accumulator
            ],
        ),
        compiler_params=pltpu.CompilerParams(
            dimension_semantics=("arbitrary",),     # carries the softmax reduction
            vmem_limit_bytes=32 * 1024 * 1024,
        ),
    )(h_in, w1, params["b1"], w2, params["b2"], wab, bab, wc_row, bc)

    # Final attention normalization on the tiny [1, N] vector (lane-dense).
    A = jax.nn.softmax(logits[:, :N], axis=1)
    return m, A


def init_params(key, size):
    """size = [L0, L1, L2, L3] as in the PyTorch module."""
    s0, s1, s2, s3 = size
    ks = jax.random.split(key, 10)

    def lin(kw, kb, fan_in, fan_out):
        w = jax.random.normal(kw, (fan_in, fan_out), jnp.float32) * 0.05
        b = jax.random.normal(kb, (1, fan_out), jnp.float32) * 0.05
        return w, b

    w1, b1 = lin(ks[0], ks[1], s0, s1)
    w2, b2 = lin(ks[2], ks[3], s1, s2)
    wa, ba = lin(ks[4], ks[5], s2, s3)
    wb, bb = lin(ks[6], ks[7], s2, s3)
    wc, bc = lin(ks[8], ks[9], s3, 1)
    return dict(w1=w1, b1=b1, w2=w2, b2=b2, wa=wa, ba=ba, wb=wb, bb=bb,
                wc=wc, bc=bc)


def _reference(h, p):
    h1 = jax.nn.relu(h @ p["w1"] + p["b1"])
    h2 = jax.nn.relu(h1 @ p["w2"] + p["b2"])
    a = jnp.tanh(h2 @ p["wa"] + p["ba"])
    b = jax.nn.sigmoid(h2 @ p["wb"] + p["bb"])
    A = (a * b) @ p["wc"] + p["bc"]
    A = jax.nn.softmax(A.T, axis=1)
    M = A @ h2
    return M, A


if __name__ == "__main__":
    size = [32, 64, 64, 32]   # [L0, L1, L2, L3]
    N = 300                   # instances in the bag (exercises grid + masking)

    key = jax.random.PRNGKey(0)
    k_h, k_p = jax.random.split(key)
    h = jax.random.normal(k_h, (N, size[0]), jnp.float32)
    params = init_params(k_p, size)

    M, A = admil_no_classifier_forward(h, params, tile_n=128)
    M, A = jax.block_until_ready((M, A))

    M_ref, A_ref = _reference(h, params)
    assert M.shape == (1, size[2]) and A.shape == (1, N)
    # A is exact-f32; M uses the approximate EUP reciprocal at finalize.
    assert jnp.allclose(A, A_ref, atol=1e-6, rtol=1e-4), "A mismatch"
    assert jnp.allclose(M, M_ref, atol=1e-3, rtol=1e-2), "M mismatch"

    print("KERNEL_OK")
</pallas_src>

<mosaic_0001>
module attributes {stable_mosaic.version = 11 : i64} {
  func.func @_admil_kernel(%arg0: i32, %arg1: memref<128x32xf32, #tpu.memory_space<vmem>>, %arg2: memref<32x64xf32, #tpu.memory_space<vmem>>, %arg3: memref<1x64xf32, #tpu.memory_space<vmem>>, %arg4: memref<64x64xf32, #tpu.memory_space<vmem>>, %arg5: memref<1x64xf32, #tpu.memory_space<vmem>>, %arg6: memref<64x64xf32, #tpu.memory_space<vmem>>, %arg7: memref<1x64xf32, #tpu.memory_space<vmem>>, %arg8: memref<1x32xf32, #tpu.memory_space<vmem>>, %arg9: memref<1x1xf32, #tpu.memory_space<vmem>>, %arg10: memref<1x64xf32, #tpu.memory_space<vmem>>, %arg11: memref<1x128xf32, #tpu.memory_space<vmem>>, %arg12: memref<1x1xf32, #tpu.memory_space<vmem>>, %arg13: memref<1x1xf32, #tpu.memory_space<vmem>>, %arg14: memref<1x64xf32, #tpu.memory_space<vmem>>) attributes {dimension_semantics = [#tpu.dimension_semantics<arbitrary>], iteration_bounds = array<i64: 3>, scalar_prefetch = 0 : i64, scratch_operands = 3 : i64, tpu.core_type = #tpu.core_type<tc>, window_params = [{transform_indices = @transform_0, window_bounds = array<i64: 128, 32>}, {pipeline_mode = #tpu.pipeline_mode<synchronous>, transform_indices = @transform_1, window_bounds = array<i64: 32, 64>}, {pipeline_mode = #tpu.pipeline_mode<synchronous>, transform_indices = @transform_2, window_bounds = array<i64: 1, 64>}, {pipeline_mode = #tpu.pipeline_mode<synchronous>, transform_indices = @transform_3, window_bounds = array<i64: 64, 64>}, {pipeline_mode = #tpu.pipeline_mode<synchronous>, transform_indices = @transform_4, window_bounds = array<i64: 1, 64>}, {pipeline_mode = #tpu.pipeline_mode<synchronous>, transform_indices = @transform_5, window_bounds = array<i64: 64, 64>}, {pipeline_mode = #tpu.pipeline_mode<synchronous>, transform_indices = @transform_6, window_bounds = array<i64: 1, 64>}, {pipeline_mode = #tpu.pipeline_mode<synchronous>, transform_indices = @transform_7, window_bounds = array<i64: 1, 32>}, {pipeline_mode = #tpu.pipeline_mode<synchronous>, transform_indices = @transform_8, window_bounds = array<i64: 1, 1>}, {pipeline_mode = #tpu.pipeline_mode<synchronous>, transform_indices = @transform_9, window_bounds = array<i64: 1, 64>}, {transform_indices = @transform_10, window_bounds = array<i64: 1, 128>}]} {
    %c0_i32 = arith.constant 0 : i32
    %0 = arith.cmpi eq, %arg0, %c0_i32 : i32
    %1 = arith.extui %0 : i1 to i32
    %c0_i32_0 = arith.constant 0 : i32
    %2 = arith.cmpi ne, %1, %c0_i32_0 : i32
    scf.if %2 {
      %cst_43 = arith.constant -1.000000e+30 : f32
      %71 = vector.broadcast %cst_43 : f32 to vector<1x1xf32>
      %c0_44 = arith.constant 0 : index
      %c0_45 = arith.constant 0 : index
      %72 = vector.load %arg12[%c0_44, %c0_45] : memref<1x1xf32, #tpu.memory_space<vmem>>, vector<1x1xf32>
      tpu.vector_store %arg12[%c0_44, %c0_45], %71 {strides = array<i32>} : memref<1x1xf32, #tpu.memory_space<vmem>>, vector<1x1xf32>,
      %cst_46 = arith.constant 0.000000e+00 : f32
      %73 = vector.broadcast %cst_46 : f32 to vector<1x1xf32>
      %c0_47 = arith.constant 0 : index
      %c0_48 = arith.constant 0 : index
      %74 = vector.load %arg13[%c0_47, %c0_48] : memref<1x1xf32, #tpu.memory_space<vmem>>, vector<1x1xf32>
      tpu.vector_store %arg13[%c0_47, %c0_48], %73 {strides = array<i32>} : memref<1x1xf32, #tpu.memory_space<vmem>>, vector<1x1xf32>,
      %cst_49 = arith.constant 0.000000e+00 : f32
      %75 = vector.broadcast %cst_49 : f32 to vector<1x64xf32>
      %c0_50 = arith.constant 0 : index
      %c0_51 = arith.constant 0 : index
      %76 = vector.load %arg14[%c0_50, %c0_51] : memref<1x64xf32, #tpu.memory_space<vmem>>, vector<1x64xf32>
      tpu.vector_store %arg14[%c0_50, %c0_51], %75 {strides = array<i32>} : memref<1x64xf32, #tpu.memory_space<vmem>>, vector<1x64xf32>,
    } else {
    }
    %c0 = arith.constant 0 : index
    %c0_1 = arith.constant 0 : index
    %3 = vector.load %arg1[%c0, %c0_1] : memref<128x32xf32, #tpu.memory_space<vmem>>, vector<128x32xf32>
    %c0_2 = arith.constant 0 : index
    %c0_3 = arith.constant 0 : index
    %4 = vector.load %arg2[%c0_2, %c0_3] : memref<32x64xf32, #tpu.memory_space<vmem>>, vector<32x64xf32>
    %cst = arith.constant dense<0.000000e+00> : vector<128x64xf32>
    %5 = tpu.matmul %3, %4, %cst {dimension_numbers = #tpu.dot_dimension_numbers<[1], [0], [0], [1], [0, 0, 1, 1], [], []>} : vector<128x32xf32>, vector<32x64xf32>, vector<128x64xf32> -> vector<128x64xf32>
    %c0_4 = arith.constant 0 : index
    %c0_5 = arith.constant 0 : index
    %6 = vector.load %arg3[%c0_4, %c0_5] : memref<1x64xf32, #tpu.memory_space<vmem>>, vector<1x64xf32>
    %7 = vector.broadcast %6 : vector<1x64xf32> to vector<128x64xf32>
    %8 = arith.addf %5, %7 : vector<128x64xf32>
    %cst_6 = arith.constant 0.000000e+00 : f32
    %9 = vector.broadcast %cst_6 : f32 to vector<128x64xf32>
    %10 = arith.maximumf %8, %9 : vector<128x64xf32>
    %c0_7 = arith.constant 0 : index
    %c0_8 = arith.constant 0 : index
    %11 = vector.load %arg4[%c0_7, %c0_8] : memref<64x64xf32, #tpu.memory_space<vmem>>, vector<64x64xf32>
    %cst_9 = arith.constant dense<0.000000e+00> : vector<128x64xf32>
    %12 = tpu.matmul %10, %11, %cst_9 {dimension_numbers = #tpu.dot_dimension_numbers<[1], [0], [0], [1], [0, 0, 1, 1], [], []>} : vector<128x64xf32>, vector<64x64xf32>, vector<128x64xf32> -> vector<128x64xf32>
    %c0_10 = arith.constant 0 : index
    %c0_11 = arith.constant 0 : index
    %13 = vector.load %arg5[%c0_10, %c0_11] : memref<1x64xf32, #tpu.memory_space<vmem>>, vector<1x64xf32>
    %14 = vector.broadcast %13 : vector<1x64xf32> to vector<128x64xf32>
    %15 = arith.addf %12, %14 : vector<128x64xf32>
    %cst_12 = arith.constant 0.000000e+00 : f32
    %16 = vector.broadcast %cst_12 : f32 to vector<128x64xf32>
    %17 = arith.maximumf %15, %16 : vector<128x64xf32>
    %c0_13 = arith.constant 0 : index
    %c0_14 = arith.constant 0 : index
    %18 = vector.load %arg6[%c0_13, %c0_14] : memref<64x64xf32, #tpu.memory_space<vmem>>, vector<64x64xf32>
    %cst_15 = arith.constant dense<0.000000e+00> : vector<128x64xf32>
    %19 = tpu.matmul %17, %18, %cst_15 {dimension_numbers = #tpu.dot_dimension_numbers<[1], [0], [0], [1], [0, 0, 1, 1], [], []>} : vector<128x64xf32>, vector<64x64xf32>, vector<128x64xf32> -> vector<128x64xf32>
    %c0_16 = arith.constant 0 : index
    %c0_17 = arith.constant 0 : index
    %20 = vector.load %arg7[%c0_16, %c0_17] : memref<1x64xf32, #tpu.memory_space<vmem>>, vector<1x64xf32>
    %21 = vector.broadcast %20 : vector<1x64xf32> to vector<128x64xf32>
    %22 = arith.addf %19, %21 : vector<128x64xf32>
    %23 = vector.extract_strided_slice %22 {offsets = [0, 0], sizes = [128, 32], strides = [1, 1]} : vector<128x64xf32> to vector<128x32xf32>
    %24 = math.tanh %23 : vector<128x32xf32>
    %25 = vector.extract_strided_slice %22 {offsets = [0, 32], sizes = [128, 32], strides = [1, 1]} : vector<128x64xf32> to vector<128x32xf32>
    %26 = arith.negf %25 : vector<128x32xf32>
    %27 = math.exp %26 : vector<128x32xf32>
    %cst_18 = arith.constant 1.000000e+00 : f32
    %28 = vector.broadcast %cst_18 : f32 to vector<128x32xf32>
    %29 = arith.addf %28, %27 : vector<128x32xf32>
    %30 = arith.divf %28, %29 : vector<128x32xf32>
    %31 = arith.mulf %24, %30 : vector<128x32xf32>
    %c0_19 = arith.constant 0 : index
    %c0_20 = arith.constant 0 : index
    %32 = vector.load %arg8[%c0_19, %c0_20] : memref<1x32xf32, #tpu.memory_space<vmem>>, vector<1x32xf32>
    %cst_21 = arith.constant dense<0.000000e+00> : vector<1x128xf32>
    %33 = tpu.matmul %32, %31, %cst_21 {dimension_numbers = #tpu.dot_dimension_numbers<[1], [1], [0], [0], [0, 0, 1, 0], [], []>} : vector<1x32xf32>, vector<128x32xf32>, vector<1x128xf32> -> vector<1x128xf32>
    %c0_22 = arith.constant 0 : index
    %c0_23 = arith.constant 0 : index
    %34 = vector.load %arg9[%c0_22, %c0_23] : memref<1x1xf32, #tpu.memory_space<vmem>>, vector<1x1xf32>
    %35 = vector.broadcast %34 : vector<1x1xf32> to vector<1x128xf32>
    %36 = arith.addf %33, %35 : vector<1x128xf32>
    %c128_i32 = arith.constant 128 : i32
    %37 = arith.muli %arg0, %c128_i32 : i32
    %38 = tpu.iota {dimensions = array<i32: 1>} : vector<1x128xi32>
    %39 = vector.broadcast %37 : i32 to vector<1x128xi32>
    %40 = arith.addi %39, %38 : vector<1x128xi32>
    %c300_i32 = arith.constant 300 : i32
    %41 = vector.broadcast %c300_i32 : i32 to vector<1x128xi32>
    %42 = arith.cmpi slt, %40, %41 : vector<1x128xi32>
    %cst_24 = arith.constant -1.000000e+30 : f32
    %43 = vector.broadcast %cst_24 : f32 to vector<1x128xf32>
    %44 = arith.select %42, %36, %43 : vector<1x128xi1>, vector<1x128xf32>
    %c0_25 = arith.constant 0 : index
    %c0_26 = arith.constant 0 : index
    %45 = vector.load %arg11[%c0_25, %c0_26] : memref<1x128xf32, #tpu.memory_space<vmem>>, vector<1x128xf32>
    tpu.vector_store %arg11[%c0_25, %c0_26], %44 {strides = array<i32>} : memref<1x128xf32, #tpu.memory_space<vmem>>, vector<1x128xf32>,
    %c0_27 = arith.constant 0 : index
    %c0_28 = arith.constant 0 : index
    %46 = vector.load %arg12[%c0_27, %c0_28] : memref<1x1xf32, #tpu.memory_space<vmem>>, vector<1x1xf32>
    %cst_29 = arith.constant dense<0xFF800000> : vector<1xf32>
    %47 = vector.multi_reduction <maximumf>, %44, %cst_29 [1] : vector<1x128xf32> to vector<1xf32>
    %48 = vector.shape_cast %47 : vector<1xf32> to vector<1x1xf32>
    %49 = arith.maximumf %46, %48 : vector<1x1xf32>
    %50 = arith.subf %46, %49 : vector<1x1xf32>
    %51 = math.exp %50 : vector<1x1xf32>
    %52 = vector.broadcast %49 : vector<1x1xf32> to vector<1x128xf32>
    %53 = arith.subf %44, %52 : vector<1x128xf32>
    %54 = math.exp %53 : vector<1x128xf32>
    %c0_30 = arith.constant 0 : index
    %c0_31 = arith.constant 0 : index
    %55 = vector.load %arg13[%c0_30, %c0_31] : memref<1x1xf32, #tpu.memory_space<vmem>>, vector<1x1xf32>
    %56 = arith.mulf %51, %55 : vector<1x1xf32>
    %cst_32 = arith.constant dense<0.000000e+00> : vector<1xf32>
    %57 = vector.multi_reduction <add>, %54, %cst_32 [1] : vector<1x128xf32> to vector<1xf32>
    %58 = vector.shape_cast %57 : vector<1xf32> to vector<1x1xf32>
    %59 = arith.addf %56, %58 : vector<1x1xf32>
    %c0_33 = arith.constant 0 : index
    %c0_34 = arith.constant 0 : index
    %60 = vector.load %arg13[%c0_33, %c0_34] : memref<1x1xf32, #tpu.memory_space<vmem>>, vector<1x1xf32>
    tpu.vector_store %arg13[%c0_33, %c0_34], %59 {strides = array<i32>} : memref<1x1xf32, #tpu.memory_space<vmem>>, vector<1x1xf32>,
    %c0_35 = arith.constant 0 : index
    %c0_36 = arith.constant 0 : index
    %61 = vector.load %arg14[%c0_35, %c0_36] : memref<1x64xf32, #tpu.memory_space<vmem>>, vector<1x64xf32>
    %62 = vector.broadcast %51 : vector<1x1xf32> to vector<1x64xf32>
    %63 = arith.mulf %62, %61 : vector<1x64xf32>
    %cst_37 = arith.constant dense<0.000000e+00> : vector<1x64xf32>
    %64 = tpu.matmul %54, %17, %cst_37 {dimension_numbers = #tpu.dot_dimension_numbers<[1], [0], [0], [1], [0, 0, 1, 1], [], []>} : vector<1x128xf32>, vector<128x64xf32>, vector<1x64xf32> -> vector<1x64xf32>
    %65 = arith.addf %63, %64 : vector<1x64xf32>
    %c0_38 = arith.constant 0 : index
    %c0_39 = arith.constant 0 : index
    %66 = vector.load %arg14[%c0_38, %c0_39] : memref<1x64xf32, #tpu.memory_space<vmem>>, vector<1x64xf32>
    tpu.vector_store %arg14[%c0_38, %c0_39], %65 {strides = array<i32>} : memref<1x64xf32, #tpu.memory_space<vmem>>, vector<1x64xf32>,
    %c0_40 = arith.constant 0 : index
    %c0_41 = arith.constant 0 : index
    %67 = vector.load %arg12[%c0_40, %c0_41] : memref<1x1xf32, #tpu.memory_space<vmem>>, vector<1x1xf32>
    tpu.vector_store %arg12[%c0_40, %c0_41], %49 {strides = array<i32>} : memref<1x1xf32, #tpu.memory_space<vmem>>, vector<1x1xf32>,
    %c2_i32 = arith.constant 2 : i32
    %68 = arith.cmpi eq, %arg0, %c2_i32 : i32
    %69 = arith.extui %68 : i1 to i32
    %c0_i32_42 = arith.constant 0 : i32
    %70 = arith.cmpi ne, %69, %c0_i32_42 : i32
    scf.if %70 {
      %c0_43 = arith.constant 0 : index
      %c0_44 = arith.constant 0 : index
      %71 = vector.load %arg14[%c0_43, %c0_44] : memref<1x64xf32, #tpu.memory_space<vmem>>, vector<1x64xf32>
      %c0_45 = arith.constant 0 : index
      %c0_46 = arith.constant 0 : index
      %72 = vector.load %arg13[%c0_45, %c0_46] : memref<1x1xf32, #tpu.memory_space<vmem>>, vector<1x1xf32>
      %73 = tpu.reciprocal %72 {approx = true} : vector<1x1xf32> -> vector<1x1xf32>
      %74 = vector.broadcast %73 : vector<1x1xf32> to vector<1x64xf32>
      %75 = arith.mulf %71, %74 : vector<1x64xf32>
      %c0_47 = arith.constant 0 : index
      %c0_48 = arith.constant 0 : index
      %76 = vector.load %arg10[%c0_47, %c0_48] : memref<1x64xf32, #tpu.memory_space<vmem>>, vector<1x64xf32>
      tpu.vector_store %arg10[%c0_47, %c0_48], %75 {strides = array<i32>} : memref<1x64xf32, #tpu.memory_space<vmem>>, vector<1x64xf32>,
    } else {
    }
    return
  }
  func.func @transform_0(%arg0: i32) -> (i32, i32) {
    %c0_i32 = arith.constant 0 : i32
    %c0_i32_0 = arith.constant 0 : i32
    return %arg0, %c0_i32 : i32, i32
  }
  func.func @transform_1(%arg0: i32) -> (i32, i32) {
    %c0_i32 = arith.constant 0 : i32
    %c0_i32_0 = arith.constant 0 : i32
    %c0_i32_1 = arith.constant 0 : i32
    return %c0_i32, %c0_i32_0 : i32, i32
  }
  func.func @transform_2(%arg0: i32) -> (i32, i32) {
    %c0_i32 = arith.constant 0 : i32
    %c0_i32_0 = arith.constant 0 : i32
    %c0_i32_1 = arith.constant 0 : i32
    return %c0_i32, %c0_i32_0 : i32, i32
  }
  func.func @transform_3(%arg0: i32) -> (i32, i32) {
    %c0_i32 = arith.constant 0 : i32
    %c0_i32_0 = arith.constant 0 : i32
    %c0_i32_1 = arith.constant 0 : i32
    return %c0_i32, %c0_i32_0 : i32, i32
  }
  func.func @transform_4(%arg0: i32) -> (i32, i32) {
    %c0_i32 = arith.constant 0 : i32
    %c0_i32_0 = arith.constant 0 : i32
    %c0_i32_1 = arith.constant 0 : i32
    return %c0_i32, %c0_i32_0 : i32, i32
  }
  func.func @transform_5(%arg0: i32) -> (i32, i32) {
    %c0_i32 = arith.constant 0 : i32
    %c0_i32_0 = arith.constant 0 : i32
    %c0_i32_1 = arith.constant 0 : i32
    return %c0_i32, %c0_i32_0 : i32, i32
  }
  func.func @transform_6(%arg0: i32) -> (i32, i32) {
    %c0_i32 = arith.constant 0 : i32
    %c0_i32_0 = arith.constant 0 : i32
    %c0_i32_1 = arith.constant 0 : i32
    return %c0_i32, %c0_i32_0 : i32, i32
  }
  func.func @transform_7(%arg0: i32) -> (i32, i32) {
    %c0_i32 = arith.constant 0 : i32
    %c0_i32_0 = arith.constant 0 : i32
    %c0_i32_1 = arith.constant 0 : i32
    return %c0_i32, %c0_i32_0 : i32, i32
  }
  func.func @transform_8(%arg0: i32) -> (i32, i32) {
    %c0_i32 = arith.constant 0 : i32
    %c0_i32_0 = arith.constant 0 : i32
    %c0_i32_1 = arith.constant 0 : i32
    return %c0_i32, %c0_i32_0 : i32, i32
  }
  func.func @transform_9(%arg0: i32) -> (i32, i32) {
    %c0_i32 = arith.constant 0 : i32
    %c0_i32_0 = arith.constant 0 : i32
    %c0_i32_1 = arith.constant 0 : i32
    return %c0_i32, %c0_i32_0 : i32, i32
  }
  func.func @transform_10(%arg0: i32) -> (i32, i32) {
    %c0_i32 = arith.constant 0 : i32
    %c0_i32_0 = arith.constant 0 : i32
    return %c0_i32, %arg0 : i32, i32
  }
}

</mosaic_0001>

<llo_original>
// kernel: tpu_custom_call.1
$region0: #{tpu_custom_call.1}
  #allocation0 [shape = 'u32[]', space=smem, size = 0x4, offset = 0x4, fixed_abs, tag = 'smem constant byte address 0x4 - core index']
  #allocation1 [shape = 'u32[72,128]{1,0:T(1,128)}', space=vmem, size = 0x9000, scoped, tag = 'internal scratch']
  #allocation2 [shape = 'f32[1,1]{1,0:T(1,128)}', space=vmem, size = 0x200, scoped, tag = 'scratch operand']
  #allocation3 [shape = 'f32[1,1]{1,0:T(1,128)}', space=vmem, size = 0x200, scoped, tag = 'scratch operand']
  #allocation4 [shape = 'f32[1,64]{1,0:T(1,128)}', space=vmem, size = 0x200, scoped, tag = 'scratch operand']
  #allocation5 [shape = 'f32[1,1]{1,0:T(1,128)S(1)}', space=vmem, size = 0x200, scoped, tag = 'scoped memory for tpu_custom_call.1']
  %s0 = inlined_call_operand.vmem [shape: f32[384,32], index: 0, kind: input, shape index: {}]
  %s1 = inlined_call_operand.vmem [shape: f32[32,64], index: 1, kind: input, shape index: {}]
  %s2 = inlined_call_operand.vmem [shape: f32[1,64], index: 2, kind: input, shape index: {}]
  %s3 = inlined_call_operand.vmem [shape: f32[64,64], index: 3, kind: input, shape index: {}]
  %s4 = inlined_call_operand.vmem [shape: f32[1,64], index: 4, kind: input, shape index: {}]
  %s5 = inlined_call_operand.vmem [shape: f32[64,64], index: 5, kind: input, shape index: {}]
  %s6 = inlined_call_operand.vmem [shape: f32[1,64], index: 6, kind: input, shape index: {}]
  %s7 = inlined_call_operand.vmem [shape: f32[1,32], index: 7, kind: input, shape index: {}]
  %s8 = inlined_call_operand.<no memory space> [shape: f32[1,1], index: 8, kind: input, shape index: {}]
  %s9 = inlined_call_operand.hbm [shape: f32[1,64], index: 9, kind: output, shape index: {0}]
  %s10 = inlined_call_operand.hbm [shape: f32[1,384], index: 10, kind: output, shape index: {1}]
  %11 = xla_tuple %s9, %s10
  %s12 = sld [smem:[#allocation0]]
  $region85: #{tpu_custom_call.1} parent=0
    _
  %s14 = ssub.s32 1, %s12
  %s15 = scalar_select 0, %s14, %s12
  %v16 = vstv %s8
  %17 = vst [vmem:[#allocation5] sm:$0x1] %v16
  $region1: #{tpu_custom_call.1} parent=0
    #allocation6 [shape = 'u8[512]{0}', space=vmem, size = 0x400, scoped, tag = 'output window, operand 0, single buffered']
    #allocation7 [shape = 's32[2]{0}', space=sflag, size = 0x8, scoped, tag = 'scoped memory for tpu_custom_call.1']
    #allocation8 [shape = 'u8[1024]{0}', space=vmem, size = 0x400, scoped, tag = 'output window, operand 1']
    #allocation9 [shape = 's32[2]{0}', space=sflag, size = 0x8, scoped, tag = 'scoped memory for tpu_custom_call.1']
    %18 = vsyncpa [#allocation7], 0
    %19 = vsyncpa [#allocation9], 0
    %s20 = scalar_lea.sflag [#allocation9], 1
    %21 = vsyncpa %s20, 0
    loop: start=0, step=1, limit=5
    $region2: #{tpu_custom_call.1} parent=1 // loop_pre_header
      _
    $region3: #{tpu_custom_call.1} parent=1 // loop_header
      %s23 = sphi 0, %s27
      %p24 = scmp.ge.s32.totalorder %s23, 5
      %s33 = sphi 0, %s35
      %s36 = sphi 0, %s33
      %s37 = sphi 0, %s36
      %s53 = sphi 0, %s37
      %s57 = sphi 0, %s57
      %s59 = sphi 0, %s57
      %s60 = sphi 0, %s59
      %s74 = sphi 0, %s60
      %s78 = sphi 0, %s78
      %s80 = sphi 0, %s78
      %s81 = sphi 0, %s80
      %s95 = sphi 0, %s81
      %s99 = sphi 0, %s99
      %s101 = sphi 0, %s99
      %s102 = sphi 0, %s101
      %s116 = sphi 0, %s102
      %s120 = sphi 0, %s120
      %s122 = sphi 0, %s120
      %s123 = sphi 0, %s122
      %s137 = sphi 0, %s123
      %s141 = sphi 0, %s141
      %s143 = sphi 0, %s141
      %s144 = sphi 0, %s143
      %s158 = sphi 0, %s144
      %s162 = sphi 0, %s162
      %s164 = sphi 0, %s162
      %s165 = sphi 0, %s164
      %s179 = sphi 0, %s165
      %s183 = sphi 0, %s183
      %s185 = sphi 0, %s183
      %s186 = sphi 0, %s185
      %s200 = sphi 0, %s186
      %s204 = sphi 0, %s204
      %s206 = sphi 0, %s204
      %s207 = sphi 0, %s206
      %s221 = sphi 0, %s207
      %s225 = sphi 0, %s225
      %s227 = sphi 0, %s225
      %s228 = sphi 0, %s227
      %s242 = sphi 0, %s228
      %s248 = sphi 0, %s250
      %s251 = sphi 0, %s248
      %s252 = sphi 0, %s251
      %s268 = sphi 0, %s252
    $region4: #{tpu_custom_call.1} parent=1 // loop_header_branch
      %26 = sbr.rel (%p24) target = $region8
    $region5: #{tpu_custom_call.1} parent=1 // loop_body
      %s28 = ssub.s32 %s23, 1
      %s29 = ssub.s32 %s23, 2
      %s30 = sadd.s32 %s23, 1
      %s31 = ssub.s32 %s23, %s30
      %p32 = scmp.eq.s32.totalorder %s31, 0
      %s34 = sadd.s32 %s33, 1
      %s35 = scalar_select %p32, %s33, %s34
      %p38 = pneg %p32
      %p39 = scmp.eq.s32.totalorder %s23, 2
      %p40 = por %p38, %p39
      %p41 = scmp.ne.s32.totalorder %s33, %s36
      %p42 = scmp.eq.s32.totalorder %s23, 0
      %p43 = por %p41, %p42
      %p44 = scmp.ne.s32.totalorder %s33, %s36
      %p45 = scmp.eq.s32.totalorder %s28, 2
      %p46 = por %p44, %p45
      %p47 = scmp.ne.s32.totalorder %s36, %s37
      %p48 = scmp.eq.s32.totalorder %s28, 0
      %p49 = por %p47, %p48
      %p50 = scmp.ne.s32.totalorder %s36, %s37
      %p51 = scmp.eq.s32.totalorder %s29, 2
      %p52 = por %p50, %p51
      %p54 = scmp.ne.s32.totalorder %s37, %s53
      %p55 = scmp.eq.s32.totalorder %s29, 0
      %p56 = por %p54, %p55
      %s58 = sadd.s32 %s57, 1
      %p61 = scmp.eq.s32.totalorder %s23, 2
      %p62 = scmp.ne.s32.totalorder %s57, %s59
      %p63 = scmp.eq.s32.totalorder %s23, 0
      %p64 = por %p62, %p63
      %p65 = scmp.ne.s32.totalorder %s57, %s59
      %p66 = scmp.eq.s32.totalorder %s28, 2
      %p67 = por %p65, %p66
      %p68 = scmp.ne.s32.totalorder %s59, %s60
      %p69 = scmp.eq.s32.totalorder %s28, 0
      %p70 = por %p68, %p69
      %p71 = scmp.ne.s32.totalorder %s59, %s60
      %p72 = scmp.eq.s32.totalorder %s29, 2
      %p73 = por %p71, %p72
      %p75 = scmp.ne.s32.totalorder %s60, %s74
      %p76 = scmp.eq.s32.totalorder %s29, 0
      %p77 = por %p75, %p76
      %s79 = sadd.s32 %s78, 1
      %p82 = scmp.eq.s32.totalorder %s23, 2
      %p83 = scmp.ne.s32.totalorder %s78, %s80
      %p84 = scmp.eq.s32.totalorder %s23, 0
      %p85 = por %p83, %p84
      %p86 = scmp.ne.s32.totalorder %s78, %s80
      %p87 = scmp.eq.s32.totalorder %s28, 2
      %p88 = por %p86, %p87
      %p89 = scmp.ne.s32.totalorder %s80, %s81
      %p90 = scmp.eq.s32.totalorder %s28, 0
      %p91 = por %p89, %p90
      %p92 = scmp.ne.s32.totalorder %s80, %s81
      %p93 = scmp.eq.s32.totalorder %s29, 2
      %p94 = por %p92, %p93
      %p96 = scmp.ne.s32.totalorder %s81, %s95
      %p97 = scmp.eq.s32.totalorder %s29, 0
      %p98 = por %p96, %p97
      %s100 = sadd.s32 %s99, 1
      %p103 = scmp.eq.s32.totalorder %s23, 2
      %p104 = scmp.ne.s32.totalorder %s99, %s101
      %p105 = scmp.eq.s32.totalorder %s23, 0
      %p106 = por %p104, %p105
      %p107 = scmp.ne.s32.totalorder %s99, %s101
      %p108 = scmp.eq.s32.totalorder %s28, 2
      %p109 = por %p107, %p108
      %p110 = scmp.ne.s32.totalorder %s101, %s102
      %p111 = scmp.eq.s32.totalorder %s28, 0
      %p112 = por %p110, %p111
      %p113 = scmp.ne.s32.totalorder %s101, %s102
      %p114 = scmp.eq.s32.totalorder %s29, 2
      %p115 = por %p113, %p114
      %p117 = scmp.ne.s32.totalorder %s102, %s116
      %p118 = scmp.eq.s32.totalorder %s29, 0
      %p119 = por %p117, %p118
      %s121 = sadd.s32 %s120, 1
      %p124 = scmp.eq.s32.totalorder %s23, 2
      %p125 = scmp.ne.s32.totalorder %s120, %s122
      %p126 = scmp.eq.s32.totalorder %s23, 0
      %p127 = por %p125, %p126
      %p128 = scmp.ne.s32.totalorder %s120, %s122
      %p129 = scmp.eq.s32.totalorder %s28, 2
      %p130 = por %p128, %p129
      %p131 = scmp.ne.s32.totalorder %s122, %s123
      %p132 = scmp.eq.s32.totalorder %s28, 0
      %p133 = por %p131, %p132
      %p134 = scmp.ne.s32.totalorder %s122, %s123
      %p135 = scmp.eq.s32.totalorder %s29, 2
      %p136 = por %p134, %p135
      %p138 = scmp.ne.s32.totalorder %s123, %s137
      %p139 = scmp.eq.s32.totalorder %s29, 0
      %p140 = por %p138, %p139
      %s142 = sadd.s32 %s141, 1
      %p145 = scmp.eq.s32.totalorder %s23, 2
      %p146 = scmp.ne.s32.totalorder %s141, %s143
      %p147 = scmp.eq.s32.totalorder %s23, 0
      %p148 = por %p146, %p147
      %p149 = scmp.ne.s32.totalorder %s141, %s143
      %p150 = scmp.eq.s32.totalorder %s28, 2
      %p151 = por %p149, %p150
      %p152 = scmp.ne.s32.totalorder %s143, %s144
      %p153 = scmp.eq.s32.totalorder %s28, 0
      %p154 = por %p152, %p153
      %p155 = scmp.ne.s32.totalorder %s143, %s144
      %p156 = scmp.eq.s32.totalorder %s29, 2
      %p157 = por %p155, %p156
      %p159 = scmp.ne.s32.totalorder %s144, %s158
      %p160 = scmp.eq.s32.totalorder %s29, 0
      %p161 = por %p159, %p160
      %s163 = sadd.s32 %s162, 1
      %p166 = scmp.eq.s32.totalorder %s23, 2
      %p167 = scmp.ne.s32.totalorder %s162, %s164
      %p168 = scmp.eq.s32.totalorder %s23, 0
      %p169 = por %p167, %p168
      %p170 = scmp.ne.s32.totalorder %s162, %s164
      %p171 = scmp.eq.s32.totalorder %s28, 2
      %p172 = por %p170, %p171
      %p173 = scmp.ne.s32.totalorder %s164, %s165
      %p174 = scmp.eq.s32.totalorder %s28, 0
      %p175 = por %p173, %p174
      %p176 = scmp.ne.s32.totalorder %s164, %s165
      %p177 = scmp.eq.s32.totalorder %s29, 2
      %p178 = por %p176, %p177
      %p180 = scmp.ne.s32.totalorder %s165, %s179
      %p181 = scmp.eq.s32.totalorder %s29, 0
      %p182 = por %p180, %p181
      %s184 = sadd.s32 %s183, 1
      %p187 = scmp.eq.s32.totalorder %s23, 2
      %p188 = scmp.ne.s32.totalorder %s183, %s185
      %p189 = scmp.eq.s32.totalorder %s23, 0
      %p190 = por %p188, %p189
      %p191 = scmp.ne.s32.totalorder %s183, %s185
      %p192 = scmp.eq.s32.totalorder %s28, 2
      %p193 = por %p191, %p192
      %p194 = scmp.ne.s32.totalorder %s185, %s186
      %p195 = scmp.eq.s32.totalorder %s28, 0
      %p196 = por %p194, %p195
      %p197 = scmp.ne.s32.totalorder %s185, %s186
      %p198 = scmp.eq.s32.totalorder %s29, 2
      %p199 = por %p197, %p198
      %p201 = scmp.ne.s32.totalorder %s186, %s200
      %p202 = scmp.eq.s32.totalorder %s29, 0
      %p203 = por %p201, %p202
      %s205 = sadd.s32 %s204, 1
      %p208 = scmp.eq.s32.totalorder %s23, 2
      %p209 = scmp.ne.s32.totalorder %s204, %s206
      %p210 = scmp.eq.s32.totalorder %s23, 0
      %p211 = por %p209, %p210
      %p212 = scmp.ne.s32.totalorder %s204, %s206
      %p213 = scmp.eq.s32.totalorder %s28, 2
      %p214 = por %p212, %p213
      %p215 = scmp.ne.s32.totalorder %s206, %s207
      %p216 = scmp.eq.s32.totalorder %s28, 0
      %p217 = por %p215, %p216
      %p218 = scmp.ne.s32.totalorder %s206, %s207
      %p219 = scmp.eq.s32.totalorder %s29, 2
      %p220 = por %p218, %p219
      %p222 = scmp.ne.s32.totalorder %s207, %s221
      %p223 = scmp.eq.s32.totalorder %s29, 0
      %p224 = por %p222, %p223
      %s226 = sadd.s32 %s225, 1
      %p229 = scmp.eq.s32.totalorder %s23, 2
      %p230 = scmp.ne.s32.totalorder %s225, %s227
      %p231 = scmp.eq.s32.totalorder %s23, 0
      %p232 = por %p230, %p231
      %p233 = scmp.ne.s32.totalorder %s225, %s227
      %p234 = scmp.eq.s32.totalorder %s28, 2
      %p235 = por %p233, %p234
      %p236 = scmp.ne.s32.totalorder %s227, %s228
      %p237 = scmp.eq.s32.totalorder %s28, 0
      %p238 = por %p236, %p237
      %p239 = scmp.ne.s32.totalorder %s227, %s228
      %p240 = scmp.eq.s32.totalorder %s29, 2
      %p241 = por %p239, %p240
      %p243 = scmp.ne.s32.totalorder %s228, %s242
      %p244 = scmp.eq.s32.totalorder %s29, 0
      %p245 = por %p243, %p244
      %s246 = ssub.s32 %s23, %s30
      %p247 = scmp.eq.s32.totalorder %s246, 0
      %s249 = sadd.s32 %s248, 1
      %s250 = scalar_select %p247, %s248, %s249
      %p253 = pneg %p247
      %p254 = scmp.eq.s32.totalorder %s23, 2
      %p255 = por %p253, %p254
      %p256 = scmp.ne.s32.totalorder %s248, %s251
      %p257 = scmp.eq.s32.totalorder %s23, 0
      %p258 = por %p256, %p257
      %p259 = scmp.ne.s32.totalorder %s248, %s251
      %p260 = scmp.eq.s32.totalorder %s28, 2
      %p261 = por %p259, %p260
      %p262 = scmp.ne.s32.totalorder %s251, %s252
      %p263 = scmp.eq.s32.totalorder %s28, 0
      %p264 = por %p262, %p263
      %p265 = scmp.ne.s32.totalorder %s251, %s252
      %p266 = scmp.eq.s32.totalorder %s29, 2
      %p267 = por %p265, %p266
      %p269 = scmp.ne.s32.totalorder %s252, %s268
      %p270 = scmp.eq.s32.totalorder %s29, 0
      %p271 = por %p269, %p270
      %p272 = scmp.le.s32.totalorder 1, %s23
      %p273 = scmp.lt.s32.totalorder %s23, 4
      %p274 = pnand %p272, %p273
      %p275 = pneg %p274
      // Predicated region
      $region9: #{tpu_custom_call.1} parent=5 // pred_check
        _
      $region10: #{tpu_custom_call.1} parent=5 // pred_check_branch
        %277 = sbr.rel (%p274) target = $region12
      $region11: #{tpu_custom_call.1} parent=5 // pred_region
        %s278 = ssub.s32 %s23, 1
        // Predicated region
        $region13: #{tpu_custom_call.1} parent=11 // pred_check
          %p279 = pneg %p70
        $region14: #{tpu_custom_call.1} parent=11 // pred_check_branch
          %281 = sbr.rel (%p279) target = $region16
        $region15: #{tpu_custom_call.1} parent=11 // pred_region
          _
        $region16: #{tpu_custom_call.1} parent=11 // pred_fallthru
          _
        // Predicated region
        $region17: #{tpu_custom_call.1} parent=11 // pred_check
          %p282 = pneg %p91
        $region18: #{tpu_custom_call.1} parent=11 // pred_check_branch
          %284 = sbr.rel (%p282) target = $region20
        $region19: #{tpu_custom_call.1} parent=11 // pred_region
          _
        $region20: #{tpu_custom_call.1} parent=11 // pred_fallthru
          _
        // Predicated region
        $region21: #{tpu_custom_call.1} parent=11 // pred_check
          %p285 = pneg %p112
        $region22: #{tpu_custom_call.1} parent=11 // pred_check_branch
          %287 = sbr.rel (%p285) target = $region24
        $region23: #{tpu_custom_call.1} parent=11 // pred_region
          _
        $region24: #{tpu_custom_call.1} parent=11 // pred_fallthru
          _
        // Predicated region
        $region25: #{tpu_custom_call.1} parent=11 // pred_check
          %p288 = pneg %p133
        $region26: #{tpu_custom_call.1} parent=11 // pred_check_branch
          %290 = sbr.rel (%p288) target = $region28
        $region27: #{tpu_custom_call.1} parent=11 // pred_region
          _
        $region28: #{tpu_custom_call.1} parent=11 // pred_fallthru
          _
        // Predicated region
        $region29: #{tpu_custom_call.1} parent=11 // pred_check
          %p291 = pneg %p154
        $region30: #{tpu_custom_call.1} parent=11 // pred_check_branch
          %293 = sbr.rel (%p291) target = $region32
        $region31: #{tpu_custom_call.1} parent=11 // pred_region
          _
        $region32: #{tpu_custom_call.1} parent=11 // pred_fallthru
          _
        // Predicated region
        $region33: #{tpu_custom_call.1} parent=11 // pred_check
          %p294 = pneg %p175
        $region34: #{tpu_custom_call.1} parent=11 // pred_check_branch
          %296 = sbr.rel (%p294) target = $region36
        $region35: #{tpu_custom_call.1} parent=11 // pred_region
          _
        $region36: #{tpu_custom_call.1} parent=11 // pred_fallthru
          _
        // Predicated region
        $region37: #{tpu_custom_call.1} parent=11 // pred_check
          %p297 = pneg %p196
        $region38: #{tpu_custom_call.1} parent=11 // pred_check_branch
          %299 = sbr.rel (%p297) target = $region40
        $region39: #{tpu_custom_call.1} parent=11 // pred_region
          _
        $region40: #{tpu_custom_call.1} parent=11 // pred_fallthru
          _
        // Predicated region
        $region41: #{tpu_custom_call.1} parent=11 // pred_check
          %p300 = pneg %p217
        $region42: #{tpu_custom_call.1} parent=11 // pred_check_branch
          %302 = sbr.rel (%p300) target = $region44
        $region43: #{tpu_custom_call.1} parent=11 // pred_region
          _
        $region44: #{tpu_custom_call.1} parent=11 // pred_fallthru
          _
      $region12: #{tpu_custom_call.1} parent=5 // pred_fallthru
        _
      %p303 = scmp.lt.s32.totalorder %s23, 3
      // Predicated region
      $region45: #{tpu_custom_call.1} parent=5 // pred_check
        %p304 = pneg %p303
      $region46: #{tpu_custom_call.1} parent=5 // pred_check_branch
        %306 = sbr.rel (%p304) target = $region48
      $region47: #{tpu_custom_call.1} parent=5 // pred_region
        // Predicated region
        $region49: #{tpu_custom_call.1} parent=47 // pred_check
          %p307 = pneg %p43
        $region50: #{tpu_custom_call.1} parent=47 // pred_check_branch
          %309 = sbr.rel (%p307) target = $region52
        $region51: #{tpu_custom_call.1} parent=47 // pred_region
          %s310 = smul.u32 16, %s23
          %p311 = scmp.lt.s32.totalorder %s310, 47
          %s312 = scalar_select %p311, %s310, 47
          %s313 = smul.addr %s312, 8
          %s314 = scalar_lea.vmem %s0, %s313
          %s315 = smul.u32 16, %s23
        $region52: #{tpu_custom_call.1} parent=47 // pred_fallthru
          _
      $region48: #{tpu_custom_call.1} parent=5 // pred_fallthru
        _
      %p316 = scmp.le.s32.totalorder 1, %s23
      %p317 = scmp.lt.s32.totalorder %s23, 4
      %p318 = pnand %p316, %p317
      %p319 = pneg %p318
      // Predicated region
      $region53: #{tpu_custom_call.1} parent=5 // pred_check
        _
      $region54: #{tpu_custom_call.1} parent=5 // pred_check_branch
        %321 = sbr.rel (%p318) target = $region56
      $region55: #{tpu_custom_call.1} parent=5 // pred_region
        %s322 = ssub.s32 %s23, 1
        %s323 = smul.u32 16, %s28
        %p324 = scmp.lt.s32.totalorder %s323, 47
        %s325 = scalar_select %p324, %s323, 47
        %s326 = smul.addr %s325, 8
        %s327 = scalar_lea.vmem %s0, %s326
        %p328 = pneg %p49
        %p329 = pneg %p46
        %p330 = pneg %p70
        %p331 = pneg %p67
        %p332 = pneg %p91
        %p333 = pneg %p88
        %p334 = pneg %p112
        %p335 = pneg %p109
        %p336 = pneg %p133
        %p337 = pneg %p130
        %p338 = pneg %p154
        %p339 = pneg %p151
        %p340 = pneg %p175
        %p341 = pneg %p172
        %p342 = pneg %p196
        %p343 = pneg %p193
        %p344 = pneg %p217
        %p345 = pneg %p214
        %p346 = pneg %p238
        %p347 = pneg %p235
        %p348 = pneg %p264
        %p349 = pneg %p261
        %s350 = sand.u32 %s251, 1
        %s351 = scalar_lea.sflag [#allocation9], %s350
        %s352 = sand.u32 %s251, 1
        %s353 = scalar_lea.vmem [#allocation8], %s352
        %s354 = smul.u32 16, %s28
        %p355 = scmp.lt.s32.totalorder %s354, 47
        %s356 = scalar_select %p355, %s354, 47
        %s357 = smul.addr %s356, 8
        %s358 = scalar_lea.vmem %s0, %s357
        %s359 = smul.u32 16, %s28
        %p360 = scmp.eq.s32.totalorder %s28, 0
        // Predicated region
        $region57: #{tpu_custom_call.1} parent=55 // pred_check
          %p361 = pneg %p360
        $region58: #{tpu_custom_call.1} parent=55 // pred_check_branch
          %363 = sbr.rel (%p361) target = $region60
        $region59: #{tpu_custom_call.1} parent=55 // pred_region
          %vm364 = vcmask 0
          %365 = vst.msk [vmem:[#allocation2] sm:$0x1] %vm364, -1e+30
          %366 = vst.msk [vmem:[#allocation3] sm:$0x1] %vm364, 0.0
          %vm367 = vcmask 516096
          %368 = vst.msk [vmem:[#allocation4] sm:$0x1] %vm367, 0.0
        $region60: #{tpu_custom_call.1} parent=55 // pred_fallthru
          _
        %v369 = vld [vmem:[%s358] sm:$0xff]
        %v370 = vld [vmem:[%s358 + $0x8] sm:$0xff]
        %v371 = vld [vmem:[%s358 + $0x10] sm:$0xff]
        %v372 = vld [vmem:[%s358 + $0x18] sm:$0xff]
        %v373 = vld [vmem:[%s358 + $0x20] sm:$0xff]
        %v374 = vld [vmem:[%s358 + $0x28] sm:$0xff]
        %v375 = vld [vmem:[%s358 + $0x30] sm:$0xff]
        %v376 = vld [vmem:[%s358 + $0x38] sm:$0xff]
        %v377 = vld [vmem:[%s358 + $0x40] sm:$0xff]
        %v378 = vld [vmem:[%s358 + $0x48] sm:$0xff]
        %v379 = vld [vmem:[%s358 + $0x50] sm:$0xff]
        %v380 = vld [vmem:[%s358 + $0x58] sm:$0xff]
        %v381 = vld [vmem:[%s358 + $0x60] sm:$0xff]
        %v382 = vld [vmem:[%s358 + $0x68] sm:$0xff]
        %v383 = vld [vmem:[%s358 + $0x70] sm:$0xff]
        %v384 = vld [vmem:[%s358 + $0x78] sm:$0xff]
        %v385 = vld [vmem:[%s1] sm:$0xff]
        %v386 = vld [vmem:[%s1 + $0x8] sm:$0xff]
        %v387 = vld [vmem:[%s1 + $0x10] sm:$0xff]
        %v388 = vld [vmem:[%s1 + $0x18] sm:$0xff]
        %v389 = vld [vmem:[%s2] sm:$0x1]
        %v391 = vperm.slane %v389, 0
        %vm393 = vcmask 261120
        %v395 = vsel %vm393, %v369, 0
        %v398 = vsel %vm393, %v370, 0
        %v401 = vsel %vm393, %v371, 0
        %v404 = vsel %vm393, %v372, 0
        %v407 = vsel %vm393, %v373, 0
        %v410 = vsel %vm393, %v374, 0
        %v413 = vsel %vm393, %v375, 0
        %v416 = vsel %vm393, %v376, 0
        %v419 = vsel %vm393, %v377, 0
        %v422 = vsel %vm393, %v378, 0
        %v425 = vsel %vm393, %v379, 0
        %v428 = vsel %vm393, %v380, 0
        %v431 = vsel %vm393, %v381, 0
        %v434 = vsel %vm393, %v382, 0
        %v437 = vsel %vm393, %v383, 0
        %v440 = vsel %vm393, %v384, 0
        %442 = vmatpush.msra.mxu0 0.0
        %443 = vmatpush.msra.mxu0 0.0
        %444 = vmatpush.msra.mxu0 0.0
        %445 = vmatpush.msra.mxu0 0.0
        %446 = vmatpush.msra.mxu0 0.0
        %447 = vmatpush.msra.mxu0 0.0
        %448 = vmatpush.msra.mxu0 0.0
        %449 = vmatpush.msra.mxu0 0.0
        %450 = vmatpush.msra.mxu0 0.0
        %451 = vmatpush.msra.mxu0 0.0
        %452 = vmatpush.msra.mxu0 0.0
        %453 = vmatpush.msra.mxu0 0.0
        %454 = vmatpush.msra.mxu0 %v388
        %455 = vmatpush.msra.mxu0 %v387
        %456 = vmatpush.msra.mxu0 %v386
        %457 = vmatpush.msra.mxu0 %v385
        %458 = vmatmul.f32.gmra.mxu0 %v395
        %v459 = vpop.f32.mrf.mxu0
        %v460 = vadd.f32 %v391, %v459
        %461 = vmatmul.f32.gmra.mxu0 %v398
        %v462 = vpop.f32.mrf.mxu0
        %v463 = vadd.f32 %v391, %v462
        %464 = vmatmul.f32.gmra.mxu0 %v401
        %v465 = vpop.f32.mrf.mxu0
        %v466 = vadd.f32 %v391, %v465
        %467 = vmatmul.f32.gmra.mxu0 %v404
        %v468 = vpop.f32.mrf.mxu0
        %v469 = vadd.f32 %v391, %v468
        %470 = vmatmul.f32.gmra.mxu0 %v407
        %v471 = vpop.f32.mrf.mxu0
        %v472 = vadd.f32 %v391, %v471
        %473 = vmatmul.f32.gmra.mxu0 %v410
        %v474 = vpop.f32.mrf.mxu0
        %v475 = vadd.f32 %v391, %v474
        %476 = vmatmul.f32.gmra.mxu0 %v413
        %v477 = vpop.f32.mrf.mxu0
        %v478 = vadd.f32 %v391, %v477
        %479 = vmatmul.f32.gmra.mxu0 %v416
        %v480 = vpop.f32.mrf.mxu0
        %v481 = vadd.f32 %v391, %v480
        %482 = vmatmul.f32.gmra.mxu0 %v419
        %v483 = vpop.f32.mrf.mxu0
        %v484 = vadd.f32 %v391, %v483
        %485 = vmatmul.f32.gmra.mxu0 %v422
        %v486 = vpop.f32.mrf.mxu0
        %v487 = vadd.f32 %v391, %v486
        %488 = vmatmul.f32.gmra.mxu0 %v425
        %v489 = vpop.f32.mrf.mxu0
        %v490 = vadd.f32 %v391, %v489
        %491 = vmatmul.f32.gmra.mxu0 %v428
        %v492 = vpop.f32.mrf.mxu0
        %v493 = vadd.f32 %v391, %v492
        %494 = vmatmul.f32.gmra.mxu0 %v431
        %v495 = vpop.f32.mrf.mxu0
        %v496 = vadd.f32 %v391, %v495
        %497 = vmatmul.f32.gmra.mxu0 %v434
        %v498 = vpop.f32.mrf.mxu0
        %v499 = vadd.f32 %v391, %v498
        %500 = vmatmul.f32.gmra.mxu0 %v437
        %v501 = vpop.f32.mrf.mxu0
        %v502 = vadd.f32 %v391, %v501
        %503 = vmatmul.f32.gmra.mxu0 %v440
        %v504 = vpop.f32.mrf.mxu0
        %v505 = vadd.f32 %v391, %v504
        %506 = vdwg.mxu0
        %v507 = vmax.f32 %v460, 0.0
        %v508 = vmax.f32 %v463, 0.0
        %v509 = vmax.f32 %v466, 0.0
        %v510 = vmax.f32 %v469, 0.0
        %v511 = vmax.f32 %v472, 0.0
        %v512 = vmax.f32 %v475, 0.0
        %v513 = vmax.f32 %v478, 0.0
        %v514 = vmax.f32 %v481, 0.0
        %v515 = vmax.f32 %v484, 0.0
        %v516 = vmax.f32 %v487, 0.0
        %v517 = vmax.f32 %v490, 0.0
        %v518 = vmax.f32 %v493, 0.0
        %v519 = vmax.f32 %v496, 0.0
        %v520 = vmax.f32 %v499, 0.0
        %v521 = vmax.f32 %v502, 0.0
        %v522 = vmax.f32 %v505, 0.0
        %v523 = vld [vmem:[%s3] sm:$0xff]
        %v524 = vld [vmem:[%s3 + $0x8] sm:$0xff]
        %v525 = vld [vmem:[%s3 + $0x10] sm:$0xff]
        %v526 = vld [vmem:[%s3 + $0x18] sm:$0xff]
        %v527 = vld [vmem:[%s3 + $0x20] sm:$0xff]
        %v528 = vld [vmem:[%s3 + $0x28] sm:$0xff]
        %v529 = vld [vmem:[%s3 + $0x30] sm:$0xff]
        %v530 = vld [vmem:[%s3 + $0x38] sm:$0xff]
        %v531 = vld [vmem:[%s4] sm:$0x1]
        %v533 = vperm.slane %v531, 0
        %vm535 = vcmask 523264
        %v537 = vsel %vm535, %v507, 0
        %v540 = vsel %vm535, %v508, 0
        %v543 = vsel %vm535, %v509, 0
        %v546 = vsel %vm535, %v510, 0
        %v549 = vsel %vm535, %v511, 0
        %v552 = vsel %vm535, %v512, 0
        %v555 = vsel %vm535, %v513, 0
        %v558 = vsel %vm535, %v514, 0
        %v561 = vsel %vm535, %v515, 0
        %v564 = vsel %vm535, %v516, 0
        %v567 = vsel %vm535, %v517, 0
        %v570 = vsel %vm535, %v518, 0
        %v573 = vsel %vm535, %v519, 0
        %v576 = vsel %vm535, %v520, 0
        %v579 = vsel %vm535, %v521, 0
        %v582 = vsel %vm535, %v522, 0
        %584 = vmatpush.msra.mxu0 0.0
        %585 = vmatpush.msra.mxu0 0.0
        %586 = vmatpush.msra.mxu0 0.0
        %587 = vmatpush.msra.mxu0 0.0
        %588 = vmatpush.msra.mxu0 0.0
        %589 = vmatpush.msra.mxu0 0.0
        %590 = vmatpush.msra.mxu0 0.0
        %591 = vmatpush.msra.mxu0 0.0
        %592 = vmatpush.msra.mxu0 %v530
        %593 = vmatpush.msra.mxu0 %v529
        %594 = vmatpush.msra.mxu0 %v528
        %595 = vmatpush.msra.mxu0 %v527
        %596 = vmatpush.msra.mxu0 %v526
        %597 = vmatpush.msra.mxu0 %v525
        %598 = vmatpush.msra.mxu0 %v524
        %599 = vmatpush.msra.mxu0 %v523
        %600 = vmatmul.f32.gmra.mxu0 %v537
        %v601 = vpop.f32.mrf.mxu0
        %v602 = vadd.f32 %v533, %v601
        %603 = vmatmul.f32.gmra.mxu0 %v540
        %v604 = vpop.f32.mrf.mxu0
        %v605 = vadd.f32 %v533, %v604
        %606 = vmatmul.f32.gmra.mxu0 %v543
        %v607 = vpop.f32.mrf.mxu0
        %v608 = vadd.f32 %v533, %v607
        %609 = vmatmul.f32.gmra.mxu0 %v546
        %v610 = vpop.f32.mrf.mxu0
        %v611 = vadd.f32 %v533, %v610
        %612 = vmatmul.f32.gmra.mxu0 %v549
        %v613 = vpop.f32.mrf.mxu0
        %v614 = vadd.f32 %v533, %v613
        %615 = vmatmul.f32.gmra.mxu0 %v552
        %v616 = vpop.f32.mrf.mxu0
        %v617 = vadd.f32 %v533, %v616
        %618 = vmatmul.f32.gmra.mxu0 %v555
        %v619 = vpop.f32.mrf.mxu0
        %v620 = vadd.f32 %v533, %v619
        %621 = vmatmul.f32.gmra.mxu0 %v558
        %v622 = vpop.f32.mrf.mxu0
        %v623 = vadd.f32 %v533, %v622
        %624 = vmatmul.f32.gmra.mxu0 %v561
        %v625 = vpop.f32.mrf.mxu0
        %v626 = vadd.f32 %v533, %v625
        %627 = vmatmul.f32.gmra.mxu0 %v564
        %v628 = vpop.f32.mrf.mxu0
        %v629 = vadd.f32 %v533, %v628
        %630 = vmatmul.f32.gmra.mxu0 %v567
        %v631 = vpop.f32.mrf.mxu0
        %v632 = vadd.f32 %v533, %v631
        %633 = vmatmul.f32.gmra.mxu0 %v570
        %v634 = vpop.f32.mrf.mxu0
        %v635 = vadd.f32 %v533, %v634
        %636 = vmatmul.f32.gmra.mxu0 %v573
        %v637 = vpop.f32.mrf.mxu0
        %v638 = vadd.f32 %v533, %v637
        %639 = vmatmul.f32.gmra.mxu0 %v576
        %v640 = vpop.f32.mrf.mxu0
        %v641 = vadd.f32 %v533, %v640
        %642 = vmatmul.f32.gmra.mxu0 %v579
        %v643 = vpop.f32.mrf.mxu0
        %v644 = vadd.f32 %v533, %v643
        %645 = vmatmul.f32.gmra.mxu0 %v582
        %v646 = vpop.f32.mrf.mxu0
        %v647 = vadd.f32 %v533, %v646
        %648 = vdwg.mxu0
        %v649 = vmax.f32 %v602, 0.0
        %v650 = vmax.f32 %v605, 0.0
        %v651 = vmax.f32 %v608, 0.0
        %v652 = vmax.f32 %v611, 0.0
        %v653 = vmax.f32 %v614, 0.0
        %v654 = vmax.f32 %v617, 0.0
        %v655 = vmax.f32 %v620, 0.0
        %v656 = vmax.f32 %v623, 0.0
        %v657 = vmax.f32 %v626, 0.0
        %v658 = vmax.f32 %v629, 0.0
        %v659 = vmax.f32 %v632, 0.0
        %v660 = vmax.f32 %v635, 0.0
        %v661 = vmax.f32 %v638, 0.0
        %v662 = vmax.f32 %v641, 0.0
        %v663 = vmax.f32 %v644, 0.0
        %v664 = vmax.f32 %v647, 0.0
        %v665 = vld [vmem:[%s5] sm:$0xff]
        %v666 = vld [vmem:[%s5 + $0x8] sm:$0xff]
        %v667 = vld [vmem:[%s5 + $0x10] sm:$0xff]
        %v668 = vld [vmem:[%s5 + $0x18] sm:$0xff]
        %v669 = vld [vmem:[%s5 + $0x20] sm:$0xff]
        %v670 = vld [vmem:[%s5 + $0x28] sm:$0xff]
        %v671 = vld [vmem:[%s5 + $0x30] sm:$0xff]
        %v672 = vld [vmem:[%s5 + $0x38] sm:$0xff]
        %v673 = vld [vmem:[%s6] sm:$0x1]
        %v675 = vperm.slane %v673, 0
        %v678 = vsel %vm535, %v649, 0
        %v681 = vsel %vm535, %v650, 0
        %v684 = vsel %vm535, %v651, 0
        %v687 = vsel %vm535, %v652, 0
        %v690 = vsel %vm535, %v653, 0
        %v693 = vsel %vm535, %v654, 0
        %v696 = vsel %vm535, %v655, 0
        %v699 = vsel %vm535, %v656, 0
        %v702 = vsel %vm535, %v657, 0
        %v705 = vsel %vm535, %v658, 0
        %v708 = vsel %vm535, %v659, 0
        %v711 = vsel %vm535, %v660, 0
        %v714 = vsel %vm535, %v661, 0
        %v717 = vsel %vm535, %v662, 0
        %v720 = vsel %vm535, %v663, 0
        %v723 = vsel %vm535, %v664, 0
        %725 = vmatpush.msra.mxu0 0.0
        %726 = vmatpush.msra.mxu0 0.0
        %727 = vmatpush.msra.mxu0 0.0
        %728 = vmatpush.msra.mxu0 0.0
        %729 = vmatpush.msra.mxu0 0.0
        %730 = vmatpush.msra.mxu0 0.0
        %731 = vmatpush.msra.mxu0 0.0
        %732 = vmatpush.msra.mxu0 0.0
        %733 = vmatpush.msra.mxu0 %v672
        %734 = vmatpush.msra.mxu0 %v671
        %735 = vmatpush.msra.mxu0 %v670
        %736 = vmatpush.msra.mxu0 %v669
        %737 = vmatpush.msra.mxu0 %v668
        %738 = vmatpush.msra.mxu0 %v667
        %739 = vmatpush.msra.mxu0 %v666
        %740 = vmatpush.msra.mxu0 %v665
        %741 = vmatmul.f32.gmra.mxu0 %v678
        %v742 = vpop.f32.mrf.mxu0
        %v743 = vadd.f32 %v675, %v742
        %744 = vmatmul.f32.gmra.mxu0 %v681
        %v745 = vpop.f32.mrf.mxu0
        %v746 = vadd.f32 %v675, %v745
        %747 = vmatmul.f32.gmra.mxu0 %v684
        %v748 = vpop.f32.mrf.mxu0
        %v749 = vadd.f32 %v675, %v748
        %750 = vmatmul.f32.gmra.mxu0 %v687
        %v751 = vpop.f32.mrf.mxu0
        %v752 = vadd.f32 %v675, %v751
        %753 = vmatmul.f32.gmra.mxu0 %v690
        %v754 = vpop.f32.mrf.mxu0
        %v755 = vadd.f32 %v675, %v754
        %756 = vmatmul.f32.gmra.mxu0 %v693
        %v757 = vpop.f32.mrf.mxu0
        %v758 = vadd.f32 %v675, %v757
        %759 = vmatmul.f32.gmra.mxu0 %v696
        %v760 = vpop.f32.mrf.mxu0
        %v761 = vadd.f32 %v675, %v760
        %762 = vmatmul.f32.gmra.mxu0 %v699
        %v763 = vpop.f32.mrf.mxu0
        %v764 = vadd.f32 %v675, %v763
        %765 = vmatmul.f32.gmra.mxu0 %v702
        %v766 = vpop.f32.mrf.mxu0
        %v767 = vadd.f32 %v675, %v766
        %768 = vmatmul.f32.gmra.mxu0 %v705
        %v769 = vpop.f32.mrf.mxu0
        %v770 = vadd.f32 %v675, %v769
        %771 = vmatmul.f32.gmra.mxu0 %v708
        %v772 = vpop.f32.mrf.mxu0
        %v773 = vadd.f32 %v675, %v772
        %774 = vmatmul.f32.gmra.mxu0 %v711
        %v775 = vpop.f32.mrf.mxu0
        %v776 = vadd.f32 %v675, %v775
        %777 = vmatmul.f32.gmra.mxu0 %v714
        %v778 = vpop.f32.mrf.mxu0
        %v779 = vadd.f32 %v675, %v778
        %780 = vmatmul.f32.gmra.mxu0 %v717
        %v781 = vpop.f32.mrf.mxu0
        %v782 = vadd.f32 %v675, %v781
        %783 = vmatmul.f32.gmra.mxu0 %v720
        %v784 = vpop.f32.mrf.mxu0
        %v785 = vadd.f32 %v675, %v784
        %786 = vmatmul.f32.gmra.mxu0 %v723
        %v787 = vpop.f32.mrf.mxu0
        %v788 = vadd.f32 %v675, %v787
        %789 = vdwg.mxu0
        %v790 = vtanh.pop %v743
        %v791 = vtanh.pop %v746
        %v792 = vtanh.pop %v749
        %v793 = vtanh.pop %v752
        %v794 = vtanh.pop %v755
        %v795 = vtanh.pop %v758
        %v796 = vtanh.pop %v761
        %v797 = vtanh.pop %v764
        %v798 = vtanh.pop %v767
        %v799 = vtanh.pop %v770
        %v800 = vtanh.pop %v773
        %v801 = vtanh.pop %v776
        %v802 = vtanh.pop %v779
        %v803 = vtanh.pop %v782
        %v804 = vtanh.pop %v785
        %v805 = vtanh.pop %v788
        %v806 = vxor.u32 %v743, 2147483648
        %v807 = vxor.u32 %v746, 2147483648
        %v808 = vxor.u32 %v749, 2147483648
        %v809 = vxor.u32 %v752, 2147483648
        %v810 = vxor.u32 %v755, 2147483648
        %v811 = vxor.u32 %v758, 2147483648
        %v812 = vxor.u32 %v761, 2147483648
        %v813 = vxor.u32 %v764, 2147483648
        %v814 = vxor.u32 %v767, 2147483648
        %v815 = vxor.u32 %v770, 2147483648
        %v816 = vxor.u32 %v773, 2147483648
        %v817 = vxor.u32 %v776, 2147483648
        %v818 = vxor.u32 %v779, 2147483648
        %v819 = vxor.u32 %v782, 2147483648
        %v820 = vxor.u32 %v785, 2147483648
        %v821 = vxor.u32 %v788, 2147483648
        %v822 = vmul.f32 %v806, 1.442695
        %v823 = vpow.pop %v822
        %v824 = vmul.f32 %v807, 1.442695
        %v825 = vpow.pop %v824
        %v826 = vmul.f32 %v808, 1.442695
        %v827 = vpow.pop %v826
        %v828 = vmul.f32 %v809, 1.442695
        %v829 = vpow.pop %v828
        %v830 = vmul.f32 %v810, 1.442695
        %v831 = vpow.pop %v830
        %v832 = vmul.f32 %v811, 1.442695
        %v833 = vpow.pop %v832
        %v834 = vmul.f32 %v812, 1.442695
        %v835 = vpow.pop %v834
        %v836 = vmul.f32 %v813, 1.442695
        %v837 = vpow.pop %v836
        %v838 = vmul.f32 %v814, 1.442695
        %v839 = vpow.pop %v838
        %v840 = vmul.f32 %v815, 1.442695
        %v841 = vpow.pop %v840
        %v842 = vmul.f32 %v816, 1.442695
        %v843 = vpow.pop %v842
        %v844 = vmul.f32 %v817, 1.442695
        %v845 = vpow.pop %v844
        %v846 = vmul.f32 %v818, 1.442695
        %v847 = vpow.pop %v846
        %v848 = vmul.f32 %v819, 1.442695
        %v849 = vpow.pop %v848
        %v850 = vmul.f32 %v820, 1.442695
        %v851 = vpow.pop %v850
        %v852 = vmul.f32 %v821, 1.442695
        %v853 = vpow.pop %v852
        %v854 = vadd.f32 %v823, 1.0
        %v855 = vadd.f32 %v825, 1.0
        %v856 = vadd.f32 %v827, 1.0
        %v857 = vadd.f32 %v829, 1.0
        %v858 = vadd.f32 %v831, 1.0
        %v859 = vadd.f32 %v833, 1.0
        %v860 = vadd.f32 %v835, 1.0
        %v861 = vadd.f32 %v837, 1.0
        %v862 = vadd.f32 %v839, 1.0
        %v863 = vadd.f32 %v841, 1.0
        %v864 = vadd.f32 %v843, 1.0
        %v865 = vadd.f32 %v845, 1.0
        %v866 = vadd.f32 %v847, 1.0
        %v867 = vadd.f32 %v849, 1.0
        %v868 = vadd.f32 %v851, 1.0
        %v869 = vadd.f32 %v853, 1.0
        %v870 = vrcp.pop %v854
        %v871 = vmul.f32 %v854, %v870
        %v872 = vsub.f32 1.0, %v871
        %v873 = vmul.f32 %v870, %v872
        %v874 = vadd.f32 %v870, %v873
        %vm875 = vweird.f32 %v854
        %vm876 = vweird.f32 %v870
        %vm877 = vmor %vm875, %vm876
        %v878 = vsel %vm877, %v870, %v874
        %v879 = vand.u32 2147483647, %v854
        %vm880 = vcmp.eq.f32.partialorder %v879, 8.507059e+37
        %v881 = vand.u32 %v854, 2147483648
        %v882 = vor.u32 1.1754944e-38, %v881
        %v883 = vsel %vm880, %v882, %v878
        %v884 = vmul.f32 1.0, %v883
        %v885 = vrcp.pop %v855
        %v886 = vmul.f32 %v855, %v885
        %v887 = vsub.f32 1.0, %v886
        %v888 = vmul.f32 %v885, %v887
        %v889 = vadd.f32 %v885, %v888
        %vm890 = vweird.f32 %v855
        %vm891 = vweird.f32 %v885
        %vm892 = vmor %vm890, %vm891
        %v893 = vsel %vm892, %v885, %v889
        %v894 = vand.u32 2147483647, %v855
        %vm895 = vcmp.eq.f32.partialorder %v894, 8.507059e+37
        %v896 = vand.u32 %v855, 2147483648
        %v897 = vor.u32 1.1754944e-38, %v896
        %v898 = vsel %vm895, %v897, %v893
        %v899 = vmul.f32 1.0, %v898
        %v900 = vrcp.pop %v856
        %v901 = vmul.f32 %v856, %v900
        %v902 = vsub.f32 1.0, %v901
        %v903 = vmul.f32 %v900, %v902
        %v904 = vadd.f32 %v900, %v903
        %vm905 = vweird.f32 %v856
        %vm906 = vweird.f32 %v900
        %vm907 = vmor %vm905, %vm906
        %v908 = vsel %vm907, %v900, %v904
        %v909 = vand.u32 2147483647, %v856
        %vm910 = vcmp.eq.f32.partialorder %v909, 8.507059e+37
        %v911 = vand.u32 %v856, 2147483648
        %v912 = vor.u32 1.1754944e-38, %v911
        %v913 = vsel %vm910, %v912, %v908
        %v914 = vmul.f32 1.0, %v913
        %v915 = vrcp.pop %v857
        %v916 = vmul.f32 %v857, %v915
        %v917 = vsub.f32 1.0, %v916
        %v918 = vmul.f32 %v915, %v917
        %v919 = vadd.f32 %v915, %v918
        %vm920 = vweird.f32 %v857
        %vm921 = vweird.f32 %v915
        %vm922 = vmor %vm920, %vm921
        %v923 = vsel %vm922, %v915, %v919
        %v924 = vand.u32 2147483647, %v857
        %vm925 = vcmp.eq.f32.partialorder %v924, 8.507059e+37
        %v926 = vand.u32 %v857, 2147483648
        %v927 = vor.u32 1.1754944e-38, %v926
        %v928 = vsel %vm925, %v927, %v923
        %v929 = vmul.f32 1.0, %v928
        %v930 = vrcp.pop %v858
        %v931 = vmul.f32 %v858, %v930
        %v932 = vsub.f32 1.0, %v931
        %v933 = vmul.f32 %v930, %v932
        %v934 = vadd.f32 %v930, %v933
        %vm935 = vweird.f32 %v858
        %vm936 = vweird.f32 %v930
        %vm937 = vmor %vm935, %vm936
        %v938 = vsel %vm937, %v930, %v934
        %v939 = vand.u32 2147483647, %v858
        %vm940 = vcmp.eq.f32.partialorder %v939, 8.507059e+37
        %v941 = vand.u32 %v858, 2147483648
        %v942 = vor.u32 1.1754944e-38, %v941
        %v943 = vsel %vm940, %v942, %v938
        %v944 = vmul.f32 1.0, %v943
        %v945 = vrcp.pop %v859
        %v946 = vmul.f32 %v859, %v945
        %v947 = vsub.f32 1.0, %v946
        %v948 = vmul.f32 %v945, %v947
        %v949 = vadd.f32 %v945, %v948
        %vm950 = vweird.f32 %v859
        %vm951 = vweird.f32 %v945
        %vm952 = vmor %vm950, %vm951
        %v953 = vsel %vm952, %v945, %v949
        %v954 = vand.u32 2147483647, %v859
        %vm955 = vcmp.eq.f32.partialorder %v954, 8.507059e+37
        %v956 = vand.u32 %v859, 2147483648
        %v957 = vor.u32 1.1754944e-38, %v956
        %v958 = vsel %vm955, %v957, %v953
        %v959 = vmul.f32 1.0, %v958
        %v960 = vrcp.pop %v860
        %v961 = vmul.f32 %v860, %v960
        %v962 = vsub.f32 1.0, %v961
        %v963 = vmul.f32 %v960, %v962
        %v964 = vadd.f32 %v960, %v963
        %vm965 = vweird.f32 %v860
        %vm966 = vweird.f32 %v960
        %vm967 = vmor %vm965, %vm966
        %v968 = vsel %vm967, %v960, %v964
        %v969 = vand.u32 2147483647, %v860
        %vm970 = vcmp.eq.f32.partialorder %v969, 8.507059e+37
        %v971 = vand.u32 %v860, 2147483648
        %v972 = vor.u32 1.1754944e-38, %v971
        %v973 = vsel %vm970, %v972, %v968
        %v974 = vmul.f32 1.0, %v973
        %v975 = vrcp.pop %v861
        %v976 = vmul.f32 %v861, %v975
        %v977 = vsub.f32 1.0, %v976
        %v978 = vmul.f32 %v975, %v977
        %v979 = vadd.f32 %v975, %v978
        %vm980 = vweird.f32 %v861
        %vm981 = vweird.f32 %v975
        %vm982 = vmor %vm980, %vm981
        %v983 = vsel %vm982, %v975, %v979
        %v984 = vand.u32 2147483647, %v861
        %vm985 = vcmp.eq.f32.partialorder %v984, 8.507059e+37
        %v986 = vand.u32 %v861, 2147483648
        %v987 = vor.u32 1.1754944e-38, %v986
        %v988 = vsel %vm985, %v987, %v983
        %v989 = vmul.f32 1.0, %v988
        %v990 = vrcp.pop %v862
        %v991 = vmul.f32 %v862, %v990
        %v992 = vsub.f32 1.0, %v991
        %v993 = vmul.f32 %v990, %v992
        %v994 = vadd.f32 %v990, %v993
        %vm995 = vweird.f32 %v862
        %vm996 = vweird.f32 %v990
        %vm997 = vmor %vm995, %vm996
        %v998 = vsel %vm997, %v990, %v994
        %v999 = vand.u32 2147483647, %v862
        %vm1000 = vcmp.eq.f32.partialorder %v999, 8.507059e+37
        %v1001 = vand.u32 %v862, 2147483648
        %v1002 = vor.u32 1.1754944e-38, %v1001
        %v1003 = vsel %vm1000, %v1002, %v998
        %v1004 = vmul.f32 1.0, %v1003
        %v1005 = vrcp.pop %v863
        %v1006 = vmul.f32 %v863, %v1005
        %v1007 = vsub.f32 1.0, %v1006
        %v1008 = vmul.f32 %v1005, %v1007
        %v1009 = vadd.f32 %v1005, %v1008
        %vm1010 = vweird.f32 %v863
        %vm1011 = vweird.f32 %v1005
        %vm1012 = vmor %vm1010, %vm1011
        %v1013 = vsel %vm1012, %v1005, %v1009
        %v1014 = vand.u32 2147483647, %v863
        %vm1015 = vcmp.eq.f32.partialorder %v1014, 8.507059e+37
        %v1016 = vand.u32 %v863, 2147483648
        %v1017 = vor.u32 1.1754944e-38, %v1016
        %v1018 = vsel %vm1015, %v1017, %v1013
        %v1019 = vmul.f32 1.0, %v1018
        %v1020 = vrcp.pop %v864
        %v1021 = vmul.f32 %v864, %v1020
        %v1022 = vsub.f32 1.0, %v1021
        %v1023 = vmul.f32 %v1020, %v1022
        %v1024 = vadd.f32 %v1020, %v1023
        %vm1025 = vweird.f32 %v864
        %vm1026 = vweird.f32 %v1020
        %vm1027 = vmor %vm1025, %vm1026
        %v1028 = vsel %vm1027, %v1020, %v1024
        %v1029 = vand.u32 2147483647, %v864
        %vm1030 = vcmp.eq.f32.partialorder %v1029, 8.507059e+37
        %v1031 = vand.u32 %v864, 2147483648
        %v1032 = vor.u32 1.1754944e-38, %v1031
        %v1033 = vsel %vm1030, %v1032, %v1028
        %v1034 = vmul.f32 1.0, %v1033
        %v1035 = vrcp.pop %v865
        %v1036 = vmul.f32 %v865, %v1035
        %v1037 = vsub.f32 1.0, %v1036
        %v1038 = vmul.f32 %v1035, %v1037
        %v1039 = vadd.f32 %v1035, %v1038
        %vm1040 = vweird.f32 %v865
        %vm1041 = vweird.f32 %v1035
        %vm1042 = vmor %vm1040, %vm1041
        %v1043 = vsel %vm1042, %v1035, %v1039
        %v1044 = vand.u32 2147483647, %v865
        %vm1045 = vcmp.eq.f32.partialorder %v1044, 8.507059e+37
        %v1046 = vand.u32 %v865, 2147483648
        %v1047 = vor.u32 1.1754944e-38, %v1046
        %v1048 = vsel %vm1045, %v1047, %v1043
        %v1049 = vmul.f32 1.0, %v1048
        %v1050 = vrcp.pop %v866
        %v1051 = vmul.f32 %v866, %v1050
        %v1052 = vsub.f32 1.0, %v1051
        %v1053 = vmul.f32 %v1050, %v1052
        %v1054 = vadd.f32 %v1050, %v1053
        %vm1055 = vweird.f32 %v866
        %vm1056 = vweird.f32 %v1050
        %vm1057 = vmor %vm1055, %vm1056
        %v1058 = vsel %vm1057, %v1050, %v1054
        %v1059 = vand.u32 2147483647, %v866
        %vm1060 = vcmp.eq.f32.partialorder %v1059, 8.507059e+37
        %v1061 = vand.u32 %v866, 2147483648
        %v1062 = vor.u32 1.1754944e-38, %v1061
        %v1063 = vsel %vm1060, %v1062, %v1058
        %v1064 = vmul.f32 1.0, %v1063
        %v1065 = vrcp.pop %v867
        %v1066 = vmul.f32 %v867, %v1065
        %v1067 = vsub.f32 1.0, %v1066
        %v1068 = vmul.f32 %v1065, %v1067
        %v1069 = vadd.f32 %v1065, %v1068
        %vm1070 = vweird.f32 %v867
        %vm1071 = vweird.f32 %v1065
        %vm1072 = vmor %vm1070, %vm1071
        %v1073 = vsel %vm1072, %v1065, %v1069
        %v1074 = vand.u32 2147483647, %v867
        %vm1075 = vcmp.eq.f32.partialorder %v1074, 8.507059e+37
        %v1076 = vand.u32 %v867, 2147483648
        %v1077 = vor.u32 1.1754944e-38, %v1076
        %v1078 = vsel %vm1075, %v1077, %v1073
        %v1079 = vmul.f32 1.0, %v1078
        %v1080 = vrcp.pop %v868
        %v1081 = vmul.f32 %v868, %v1080
        %v1082 = vsub.f32 1.0, %v1081
        %v1083 = vmul.f32 %v1080, %v1082
        %v1084 = vadd.f32 %v1080, %v1083
        %vm1085 = vweird.f32 %v868
        %vm1086 = vweird.f32 %v1080
        %vm1087 = vmor %vm1085, %vm1086
        %v1088 = vsel %vm1087, %v1080, %v1084
        %v1089 = vand.u32 2147483647, %v868
        %vm1090 = vcmp.eq.f32.partialorder %v1089, 8.507059e+37
        %v1091 = vand.u32 %v868, 2147483648
        %v1092 = vor.u32 1.1754944e-38, %v1091
        %v1093 = vsel %vm1090, %v1092, %v1088
        %v1094 = vmul.f32 1.0, %v1093
        %v1095 = vrcp.pop %v869
        %v1096 = vmul.f32 %v869, %v1095
        %v1097 = vsub.f32 1.0, %v1096
        %v1098 = vmul.f32 %v1095, %v1097
        %v1099 = vadd.f32 %v1095, %v1098
        %vm1100 = vweird.f32 %v869
        %vm1101 = vweird.f32 %v1095
        %vm1102 = vmor %vm1100, %vm1101
        %v1103 = vsel %vm1102, %v1095, %v1099
        %v1104 = vand.u32 2147483647, %v869
        %vm1105 = vcmp.eq.f32.partialorder %v1104, 8.507059e+37
        %v1106 = vand.u32 %v869, 2147483648
        %v1107 = vor.u32 1.1754944e-38, %v1106
        %v1108 = vsel %vm1105, %v1107, %v1103
        %v1109 = vmul.f32 1.0, %v1108
        %1126 = vrot.lane.b32.xlu0 %v884, 96
        %v1127 = vpop.permute.xlu0 %1126
        %1128 = vrot.lane.b32.xlu0 %v899, 96
        %v1129 = vpop.permute.xlu0 %1128
        %1130 = vrot.lane.b32.xlu0 %v914, 96
        %v1131 = vpop.permute.xlu0 %1130
        %1132 = vrot.lane.b32.xlu0 %v929, 96
        %v1133 = vpop.permute.xlu0 %1132
        %1134 = vrot.lane.b32.xlu0 %v944, 96
        %v1135 = vpop.permute.xlu0 %1134
        %1136 = vrot.lane.b32.xlu0 %v959, 96
        %v1137 = vpop.permute.xlu0 %1136
        %1138 = vrot.lane.b32.xlu0 %v974, 96
        %v1139 = vpop.permute.xlu0 %1138
        %1140 = vrot.lane.b32.xlu0 %v989, 96
        %v1141 = vpop.permute.xlu0 %1140
        %1142 = vrot.lane.b32.xlu0 %v1004, 96
        %v1143 = vpop.permute.xlu0 %1142
        %1144 = vrot.lane.b32.xlu0 %v1019, 96
        %v1145 = vpop.permute.xlu0 %1144
        %1146 = vrot.lane.b32.xlu0 %v1034, 96
        %v1147 = vpop.permute.xlu0 %1146
        %1148 = vrot.lane.b32.xlu0 %v1049, 96
        %v1149 = vpop.permute.xlu0 %1148
        %1150 = vrot.lane.b32.xlu0 %v1064, 96
        %v1151 = vpop.permute.xlu0 %1150
        %1152 = vrot.lane.b32.xlu0 %v1079, 96
        %v1153 = vpop.permute.xlu0 %1152
        %1154 = vrot.lane.b32.xlu0 %v1094, 96
        %v1155 = vpop.permute.xlu0 %1154
        %1156 = vrot.lane.b32.xlu0 %v1109, 96
        %v1157 = vpop.permute.xlu0 %1156
        %v1174 = vmul.f32 %v790, %v1127
        %v1175 = vmul.f32 %v791, %v1129
        %v1176 = vmul.f32 %v792, %v1131
        %v1177 = vmul.f32 %v793, %v1133
        %v1178 = vmul.f32 %v794, %v1135
        %v1179 = vmul.f32 %v795, %v1137
        %v1180 = vmul.f32 %v796, %v1139
        %v1181 = vmul.f32 %v797, %v1141
        %v1182 = vmul.f32 %v798, %v1143
        %v1183 = vmul.f32 %v799, %v1145
        %v1184 = vmul.f32 %v800, %v1147
        %v1185 = vmul.f32 %v801, %v1149
        %v1186 = vmul.f32 %v802, %v1151
        %v1187 = vmul.f32 %v803, %v1153
        %v1188 = vmul.f32 %v804, %v1155
        %v1189 = vmul.f32 %v805, %v1157
        %v1190 = vld [vmem:[%s7] sm:$0x1]
        %v1191 = vld [vmem:[#allocation5] sm:$0x1]
        %1193 = vset.pattern.permute.xlu0 0
        %1194 = vperm.xlu0 %1193, %v1191
        %v1195 = vpop.permute.xlu0 %1194
        %v1197 = vperm.slane %v1195, 0
        %v1199 = vsel %vm393, %v1190, 0
        %v1202 = vsel %vm393, %v1174, 0
        %v1205 = vsel %vm393, %v1175, 0
        %v1208 = vsel %vm393, %v1176, 0
        %v1211 = vsel %vm393, %v1177, 0
        %v1214 = vsel %vm393, %v1178, 0
        %v1217 = vsel %vm393, %v1179, 0
        %v1220 = vsel %vm393, %v1180, 0
        %v1223 = vsel %vm393, %v1181, 0
        %v1226 = vsel %vm393, %v1182, 0
        %v1229 = vsel %vm393, %v1183, 0
        %v1232 = vsel %vm393, %v1184, 0
        %v1235 = vsel %vm393, %v1185, 0
        %v1238 = vsel %vm393, %v1186, 0
        %v1241 = vsel %vm393, %v1187, 0
        %v1244 = vsel %vm393, %v1188, 0
        %v1247 = vsel %vm393, %v1189, 0
        %1249 = vmatpush.xpose.msra.mxu0 %v1247
        %1250 = vmatpush.xpose.msra.mxu0 %v1244
        %1251 = vmatpush.xpose.msra.mxu0 %v1241
        %1252 = vmatpush.xpose.msra.mxu0 %v1238
        %1253 = vmatpush.xpose.msra.mxu0 %v1235
        %1254 = vmatpush.xpose.msra.mxu0 %v1232
        %1255 = vmatpush.xpose.msra.mxu0 %v1229
        %1256 = vmatpush.xpose.msra.mxu0 %v1226
        %1257 = vmatpush.xpose.msra.mxu0 %v1223
        %1258 = vmatpush.xpose.msra.mxu0 %v1220
        %1259 = vmatpush.xpose.msra.mxu0 %v1217
        %1260 = vmatpush.xpose.msra.mxu0 %v1214
        %1261 = vmatpush.xpose.msra.mxu0 %v1211
        %1262 = vmatpush.xpose.msra.mxu0 %v1208
        %1263 = vmatpush.xpose.msra.mxu0 %v1205
        %1264 = vmatpush.xpose.msra.mxu0 %v1202
        %1265 = vmatmul.f32.gmra.mxu0 %v1199
        %v1266 = vpop.f32.mrf.mxu0
        %v1267 = vadd.f32 %v1197, %v1266
        %1268 = vdwg.mxu0
        %s1269 = smul.u32 %s28, 128
        %v1270 = vlaneseq
        %v1271 = vand.u32 %v1270, 127
        %v1272 = vstv %s1269
        %v1273 = vadd.s32 %v1272, %v1271
        %vm1274 = vcmp.lt.s32.totalorder %v1273, 300
        %v1275 = vsel %vm1274, %v1267, -1e+30
        %1276 = vst [vmem:[%s353] sm:$0x1] %v1275
        %v1277 = vld [vmem:[#allocation2] sm:$0x1]
        %vm1278 = vcmask 1040384
        %v1279 = vsel %vm1278, %v1275, -inf
        %1280 = vmax.xlane.f32.xlu0 %v1279
        %v1281 = vpop.xlane.xlu0 %1280
        %v1282 = vmax.f32 %v1277, %v1281
        %v1283 = vsub.f32 %v1277, %v1282
        %v1284 = vmul.f32 %v1283, 1.442695
        %v1285 = vpow.pop %v1284
        %1287 = vset.pattern.permute.xlu0 0
        %1288 = vperm.xlu0 %1287, %v1282
        %v1289 = vpop.permute.xlu0 %1288
        %v1291 = vperm.slane %v1289, 0
        %v1292 = vsub.f32 %v1275, %v1291
        %v1293 = vmul.f32 %v1292, 1.442695
        %v1294 = vpow.pop %v1293
        %v1295 = vld [vmem:[#allocation3] sm:$0x1]
        %v1296 = vmul.f32 %v1285, %v1295
        %v1297 = vsel %vm1278, %v1294, 0.0
        %1298 = vadd.xlane.f32.xlu0 %v1297
        %v1299 = vpop.xlane.xlu0 %1298
        %v1300 = vadd.f32 %v1296, %v1299
        %vm1301 = vcmask 0
        %1302 = vst.msk [vmem:[#allocation3] sm:$0x1] %vm1301, %v1300
        %v1303 = vld [vmem:[#allocation4] sm:$0x1]
        %1305 = vset.pattern.permute.xlu0 0
        %1306 = vperm.xlu0 %1305, %v1285
        %v1307 = vpop.permute.xlu0 %1306
        %v1309 = vperm.slane %v1307, 0
        %v1310 = vmul.f32 %v1309, %v1303
        %1311 = vmatpush.msra.mxu0 %v664
        %1312 = vmatpush.msra.mxu0 %v663
        %1313 = vmatpush.msra.mxu0 %v662
        %1314 = vmatpush.msra.mxu0 %v661
        %1315 = vmatpush.msra.mxu0 %v660
        %1316 = vmatpush.msra.mxu0 %v659
        %1317 = vmatpush.msra.mxu0 %v658
        %1318 = vmatpush.msra.mxu0 %v657
        %1319 = vmatpush.msra.mxu0 %v656
        %1320 = vmatpush.msra.mxu0 %v655
        %1321 = vmatpush.msra.mxu0 %v654
        %1322 = vmatpush.msra.mxu0 %v653
        %1323 = vmatpush.msra.mxu0 %v652
        %1324 = vmatpush.msra.mxu0 %v651
        %1325 = vmatpush.msra.mxu0 %v650
        %1326 = vmatpush.msra.mxu0 %v649
        %1327 = vmatmul.f32.gmra.mxu0 %v1294
        %v1328 = vpop.f32.mrf.mxu0
        %v1329 = vadd.f32 0.0, %v1328
        %1330 = vdwg.mxu0
        %v1331 = vadd.f32 %v1310, %v1329
        %vm1332 = vcmask 516096
        %1333 = vst.msk [vmem:[#allocation4] sm:$0x1] %vm1332, %v1331
        %1334 = vst.msk [vmem:[#allocation2] sm:$0x1] %vm1301, %v1282
        %p1335 = scmp.eq.s32.totalorder %s28, 2
        // Predicated region
        $region61: #{tpu_custom_call.1} parent=55 // pred_check
          %p1336 = pneg %p1335
        $region62: #{tpu_custom_call.1} parent=55 // pred_check_branch
          %1338 = sbr.rel (%p1336) target = $region64
        $region63: #{tpu_custom_call.1} parent=55 // pred_region
          %v1339 = vld [vmem:[#allocation4] sm:$0x1]
          %v1340 = vld [vmem:[#allocation3] sm:$0x1]
          %v1341 = vrcp.pop %v1340
          %1343 = vset.pattern.permute.xlu0 0
          %1344 = vperm.xlu0 %1343, %v1341
          %v1345 = vpop.permute.xlu0 %1344
          %v1347 = vperm.slane %v1345, 0
          %v1348 = vmul.f32 %v1339, %v1347
          %1349 = vst.msk [vmem:[#allocation6] sm:$0x1] %vm1332, %v1348
        $region64: #{tpu_custom_call.1} parent=55 // pred_fallthru
          _
        %s1350 = sand.u32 %s251, 1
        %s1351 = scalar_lea.sflag [#allocation9], %s1350
        %s1352 = sand.u32 %s251, 1
        %s1353 = scalar_lea.vmem [#allocation8], %s1352
        // Predicated region
        $region65: #{tpu_custom_call.1} parent=55 // pred_check
          %p1354 = pneg %p235
        $region66: #{tpu_custom_call.1} parent=55 // pred_check_branch
          %1356 = sbr.rel (%p1354) target = $region68
        $region67: #{tpu_custom_call.1} parent=55 // pred_region
          %1358 = vsyncadd [#allocation7], 0
          %s1360 = sshll.u32 [#allocation6], 4
          %s1361 = int_to_ptr.vmem [resolvable:$true] %s1360
          %s1362 = sshll.u32 %s9, 4
          %s1363 = int_to_ptr.hbm [resolvable:$true] %s1362
          %1365 = dma.vmem_to_hbm [thread:$0]  %s1361, 16, %s1363, [#allocation7]
        $region68: #{tpu_custom_call.1} parent=55 // pred_fallthru
          _
        // Predicated region
        $region69: #{tpu_custom_call.1} parent=55 // pred_check
          %p1366 = pneg %p261
        $region70: #{tpu_custom_call.1} parent=55 // pred_check_branch
          %1368 = sbr.rel (%p1366) target = $region72
        $region71: #{tpu_custom_call.1} parent=55 // pred_region
          %1370 = vsyncadd %s1351, 0
          %s1371 = scalar_lea.hbm %s10, %s28
          %s1373 = sshll.u32 %s1353, 4
          %s1374 = int_to_ptr.vmem [resolvable:$true] %s1373
          %s1375 = sshll.u32 %s1371, 4
          %s1376 = int_to_ptr.hbm [resolvable:$true] %s1375
          %1378 = dma.vmem_to_hbm [thread:$0]  %s1374, 16, %s1376, %s1351
        $region72: #{tpu_custom_call.1} parent=55 // pred_fallthru
          _
        // Predicated region
        $region73: #{tpu_custom_call.1} parent=55 // pred_check
          %p1379 = pneg %p235
        $region74: #{tpu_custom_call.1} parent=55 // pred_check_branch
          %1381 = sbr.rel (%p1379) target = $region76
        $region75: #{tpu_custom_call.1} parent=55 // pred_region
          %1383 = dma.done [#allocation7], 16
        $region76: #{tpu_custom_call.1} parent=55 // pred_fallthru
          _
      $region56: #{tpu_custom_call.1} parent=5 // pred_fallthru
        _
      %p1384 = scmp.le.s32.totalorder 2, %s23
      // Predicated region
      $region77: #{tpu_custom_call.1} parent=5 // pred_check
        %p1385 = pneg %p1384
      $region78: #{tpu_custom_call.1} parent=5 // pred_check_branch
        %1387 = sbr.rel (%p1385) target = $region80
      $region79: #{tpu_custom_call.1} parent=5 // pred_region
        %s1388 = ssub.s32 %s23, 2
        // Predicated region
        $region81: #{tpu_custom_call.1} parent=79 // pred_check
          %p1389 = pneg %p267
        $region82: #{tpu_custom_call.1} parent=79 // pred_check_branch
          %1391 = sbr.rel (%p1389) target = $region84
        $region83: #{tpu_custom_call.1} parent=79 // pred_region
          %s1392 = sand.u32 %s252, 1
          %s1393 = scalar_lea.sflag [#allocation9], %s1392
          %s1394 = sand.u32 %s252, 1
          %s1395 = scalar_lea.vmem [#allocation8], %s1394
          %1397 = dma.done %s1393, 16
        $region84: #{tpu_custom_call.1} parent=79 // pred_fallthru
          _
      $region80: #{tpu_custom_call.1} parent=5 // pred_fallthru
        _
    $region6: #{tpu_custom_call.1} parent=1 // loop_footer
      %s27 = sadd.s32 1, %s23
    $region7: #{tpu_custom_call.1} parent=1 // loop_footer_branch
      %22 = sbr.rel target = $region3
    $region8: #{tpu_custom_call.1} parent=1 // loop_exit
      _
    %1398 = vsyncpa [#allocation7], 1
    %s1399 = scalar_lea.sflag [#allocation7], 1
    %1400 = vsyncpa %s1399, 1
    %1401 = vsyncpa [#allocation9], 1
    %s1402 = scalar_lea.sflag [#allocation9], 1
    %1403 = vsyncpa %s1402, 1

</llo_original>
